<compile_context>
chip_gen: v7x
topology: tpu7x:2x2x1
jax: 0.10.0
libtpu: 0.0.40
codegen_flags: <defaults>
</compile_context>

<pallas_src>
import jax
import jax.numpy as jnp
from jax import lax
from jax.experimental import pallas as pl
from jax.experimental.pallas import tpu as pltpu

EPS = 1e-5


# -----------------------------------------------------------------------------
# Host-side parameter expansion (pure function of the params; built ONCE per
# parameter set, outside the per-step forward).
# -----------------------------------------------------------------------------
def _block_diag_1x1(w, w_sp, dtype):
    """(Cin, Cout) 1x1-conv weight -> (w_sp*Cin, w_sp*Cout) block-diagonal."""
    c_in, c_out = w.shape
    eye = jnp.eye(w_sp, dtype=w.dtype)
    big = jnp.einsum('xy,co->xcyo', eye, w).reshape(w_sp * c_in, w_sp * c_out)
    return big.astype(dtype)


def _banded_3x3_row(w_row, w_sp, dtype):
    """One ky-row (3, Cb, Cb) of an HWIO 3x3 weight -> (w_sp*Cb, w_sp*Cb)
    banded matrix implementing the dx in {-1,0,1} taps with SAME padding."""
    cb = w_row.shape[-1]
    xi = jnp.arange(w_sp)[:, None]          # x_in  (row block)
    xo = jnp.arange(w_sp)[None, :]          # x_out (col block)
    dx = xi - xo + 1                        # kx index into w_row
    valid = (dx >= 0) & (dx <= 2)
    sel = jnp.where(valid[:, :, None, None], w_row[jnp.clip(dx, 0, 2)], 0.0)
    big = jnp.transpose(sel, (0, 2, 1, 3)).reshape(w_sp * cb, w_sp * cb)
    return big.astype(dtype)


def prepare_params(params, w_sp):
    """Expand conv/BN params into the lane-fused operands the kernel consumes."""
    (w1, w2, w3, wsc, g1, b1, g2, b2, g3, b3, gsc, bsc) = params
    c_in, c_b = w1.shape
    c_out = w3.shape[1]

    w1_big = _block_diag_1x1(w1, w_sp, jnp.bfloat16)                 # (W*Cin, W*Cb)
    # All three ky taps stacked along K -> one deep matmul in the kernel.
    w2_cat = jnp.concatenate(
        [_banded_3x3_row(w2[k], w_sp, jnp.bfloat16) for k in range(3)],
        axis=0)                                                      # (3*W*Cb, W*Cb)
    w3_big = _block_diag_1x1(w3, w_sp, jnp.bfloat16)                 # (W*Cb, W*Cout)
    wsc_big = _block_diag_1x1(wsc, w_sp, jnp.bfloat16)               # (W*Cin, W*Cout)

    def tile_cb(v, c):          # per-channel affine param -> (1, W*c) lane layout
        return jnp.tile(v.reshape(1, c), (1, w_sp)).astype(jnp.float32)

    return (w1_big, w2_cat, w3_big, wsc_big,
            tile_cb(g1, c_in), tile_cb(b1, c_in),
            tile_cb(g2, c_b), tile_cb(b2, c_b),
            tile_cb(g3, c_b), tile_cb(b3, c_b),
            tile_cb(gsc, c_out), tile_cb(bsc, c_out))


# -----------------------------------------------------------------------------
# Fused Bottleneck kernel.
# -----------------------------------------------------------------------------
def _make_kernel(N, H, W, Cin, Cb, Cout):
    R = N * H
    inv_count = 1.0 / float(N * H * W)

    def _chan_reduce(s, c):
        """(1, W*c) lane-fused row-sums -> per-channel totals broadcast back to
        every lane of that channel (channel = lane % c).  log2(W)-step lane-roll
        butterfly (XLU); requires W to be a power of two."""
        shift = c
        while shift < W * c:
            s = s + pltpu.roll(s, shift=shift, axis=1)
            shift *= 2
        return s

    def _bn(h, c, gamma_b, beta_b, relu):
        """One-pass training-mode BN (batch stats, biased variance) on an
        (R, W*c) lane-fused f32 slab.  Rows reduced first, then the lane
        butterfly -- no MXU work, all f32."""
        s1 = _chan_reduce(jnp.sum(h, axis=0, keepdims=True), c)
        s2 = _chan_reduce(jnp.sum(h * h, axis=0, keepdims=True), c)
        mean = s1 * inv_count
        var = jnp.maximum(s2 * inv_count - mean * mean, 0.0)
        y = (h - mean) * lax.rsqrt(var + EPS) * gamma_b + beta_b
        return jnp.maximum(y, 0.0) if relu else y

    def kernel(x_ref, w1_ref, w2_ref, w3_ref, wsc_ref,
               g1_ref, b1_ref, g2_ref, b2_ref, g3_ref, b3_ref,
               gsc_ref, bsc_ref, out_ref):
        x = x_ref[...]                                           # (R, W*Cin) f32

        # ---- stage 1: BN1 -> ReLU -> 1x1 conv (block-diag matmul, K=W*Cin) ----
        a1 = _bn(x, Cin, g1_ref[...], b1_ref[...], True)
        h1 = jnp.dot(a1.astype(jnp.bfloat16), w1_ref[...],
                     preferred_element_type=jnp.float32)         # (R, W*Cb)

        # ---- stage 2: BN2 -> ReLU -> 3x3 conv (SAME) ----
        # W-shift + zero padding baked into the banded weights; +-1 H-shift via
        # sublane roll + boundary mask (XLU); three ky taps K-concatenated into
        # a single bf16 matmul.
        a2 = _bn(h1, Cb, g2_ref[...], b2_ref[...], True)
        row = lax.broadcasted_iota(jnp.int32, (R, 1), 0) % H
        up = jnp.where(row != 0, pltpu.roll(a2, shift=1, axis=0), 0.0)
        dn = jnp.where(row != H - 1, pltpu.roll(a2, shift=R - 1, axis=0), 0.0)
        a2cat = jnp.concatenate([up, a2, dn], axis=1).astype(jnp.bfloat16)
        h2 = jnp.dot(a2cat, w2_ref[...],
                     preferred_element_type=jnp.float32)         # (R, W*Cb)

        # ---- stage 3: BN3 -> ReLU -> 1x1 conv (K=W*Cb) ----
        a3 = _bn(h2, Cb, g3_ref[...], b3_ref[...], True)
        h3 = jnp.dot(a3.astype(jnp.bfloat16), w3_ref[...],
                     preferred_element_type=jnp.float32)         # (R, W*Cout)

        # ---- shortcut: 1x1 conv -> BN (no ReLU) ----
        sc = jnp.dot(x.astype(jnp.bfloat16), wsc_ref[...],
                     preferred_element_type=jnp.float32)
        sc = _bn(sc, Cout, gsc_ref[...], bsc_ref[...], False)

        out_ref[...] = h3 + sc                                   # lane-dense store

    return kernel


def bottleneck_forward(x_nchw, prepped):
    """x_nchw: (N, Cin, H, W) float32. Returns (N, Cout, H, W) float32."""
    N, Cin, H, W = x_nchw.shape
    assert W & (W - 1) == 0, "lane-roll butterfly assumes W is a power of two"
    w1_big, w2_cat, w3_big, wsc_big = prepped[:4]
    Lb, Lout = w1_big.shape[1], w3_big.shape[1]
    Cb, Cout = Lb // W, Lout // W
    R, Lin = N * H, W * Cin

    # Lane-fused input slab: rows = (n, h), lanes = (w, c)  ->  lane-dense loads.
    x_slab = jnp.transpose(x_nchw, (0, 2, 3, 1)).reshape(R, Lin)

    out_slab = pl.pallas_call(
        _make_kernel(N, H, W, Cin, Cb, Cout),
        out_shape=jax.ShapeDtypeStruct((R, Lout), jnp.float32),
        in_specs=[pl.BlockSpec(memory_space=pltpu.MemorySpace.VMEM)] * 13,
        out_specs=pl.BlockSpec(memory_space=pltpu.MemorySpace.VMEM),
    )(x_slab, *prepped)

    return jnp.transpose(out_slab.reshape(N, H, W, Cout), (0, 3, 1, 2))  # NHWC->NCHW


# -----------------------------------------------------------------------------
# Pure-JAX reference (same math, XLA convs, f32 throughout) for validation.
# -----------------------------------------------------------------------------
def reference_forward(x_nchw, params):
    (w1, w2, w3, wsc, g1, b1, g2, b2, g3, b3, gsc, bsc) = params
    x = jnp.transpose(x_nchw, (0, 2, 3, 1))

    def bn(h, g, b):
        mean = h.mean(axis=(0, 1, 2))
        var = ((h - mean) ** 2).mean(axis=(0, 1, 2))
        return (h - mean) / jnp.sqrt(var + EPS) * g.reshape(-1) + b.reshape(-1)

    a1 = jax.nn.relu(bn(x, g1, b1))
    h1 = jnp.einsum('nhwc,co->nhwo', a1, w1)
    a2 = jax.nn.relu(bn(h1, g2, b2))
    h2 = lax.conv_general_dilated(a2, w2, (1, 1), 'SAME',
                                  dimension_numbers=('NHWC', 'HWIO', 'NHWC'))
    a3 = jax.nn.relu(bn(h2, g3, b3))
    h3 = jnp.einsum('nhwc,co->nhwo', a3, w3)
    sc = bn(jnp.einsum('nhwc,co->nhwo', x, wsc), gsc, bsc)
    return jnp.transpose(h3 + sc, (0, 3, 1, 2))


if __name__ == "__main__":
    # Small, module-consistent shapes: in=16, bottleneck=8, out=32, 16x16 spatial.
    N, Cin, Cb, Cout, H, W = 2, 16, 8, 32, 16, 16

    key = jax.random.PRNGKey(0)
    ks = jax.random.split(key, 13)

    x = jax.random.normal(ks[0], (N, Cin, H, W), jnp.float32)            # NCHW input

    # Conv weights (bias=False), stored channels-last for the kernel:
    w1 = 0.1 * jax.random.normal(ks[1], (Cin, Cb), jnp.float32)          # 1x1
    w2 = 0.1 * jax.random.normal(ks[2], (3, 3, Cb, Cb), jnp.float32)     # 3x3, HWIO
    w3 = 0.1 * jax.random.normal(ks[3], (Cb, Cout), jnp.float32)         # 1x1
    wsc = 0.1 * jax.random.normal(ks[4], (Cin, Cout), jnp.float32)       # shortcut 1x1

    # BN affine params (gamma, beta), shaped (1, C).
    g1 = 1.0 + 0.1 * jax.random.normal(ks[5], (1, Cin), jnp.float32)
    b1 = 0.1 * jax.random.normal(ks[6], (1, Cin), jnp.float32)
    g2 = 1.0 + 0.1 * jax.random.normal(ks[7], (1, Cb), jnp.float32)
    b2 = 0.1 * jax.random.normal(ks[8], (1, Cb), jnp.float32)
    g3 = 1.0 + 0.1 * jax.random.normal(ks[9], (1, Cb), jnp.float32)
    b3 = 0.1 * jax.random.normal(ks[10], (1, Cb), jnp.float32)
    gsc = 1.0 + 0.1 * jax.random.normal(ks[11], (1, Cout), jnp.float32)
    bsc = 0.1 * jax.random.normal(ks[12], (1, Cout), jnp.float32)

    params = (w1, w2, w3, wsc, g1, b1, g2, b2, g3, b3, gsc, bsc)

    # Weight expansion is hoisted: done once per parameter set, not per step.
    prepped = jax.block_until_ready(prepare_params(params, W))

    fwd = jax.jit(bottleneck_forward)
    out = jax.block_until_ready(fwd(x, prepped))
    ref = jax.block_until_ready(reference_forward(x, params))

    err = float(jnp.max(jnp.abs(out - ref)))
    assert out.shape == (N, Cout, H, W), out.shape
    # bf16 MXU inputs (f32 accumulation) vs. an all-f32 reference: expected
    # max abs error ~1e-2 on O(1) outputs.
    assert err < 5e-2, f"max abs error too large: {err}"

    print("KERNEL_OK")
</pallas_src>

<mosaic_0001>
module attributes {stable_mosaic.version = 11 : i64} {
  func.func @kernel(%arg0: memref<32x256xf32, #tpu.memory_space<vmem>>, %arg1: memref<256x128xbf16, #tpu.memory_space<vmem>>, %arg2: memref<384x128xbf16, #tpu.memory_space<vmem>>, %arg3: memref<128x512xbf16, #tpu.memory_space<vmem>>, %arg4: memref<256x512xbf16, #tpu.memory_space<vmem>>, %arg5: memref<1x256xf32, #tpu.memory_space<vmem>>, %arg6: memref<1x256xf32, #tpu.memory_space<vmem>>, %arg7: memref<1x128xf32, #tpu.memory_space<vmem>>, %arg8: memref<1x128xf32, #tpu.memory_space<vmem>>, %arg9: memref<1x128xf32, #tpu.memory_space<vmem>>, %arg10: memref<1x128xf32, #tpu.memory_space<vmem>>, %arg11: memref<1x512xf32, #tpu.memory_space<vmem>>, %arg12: memref<1x512xf32, #tpu.memory_space<vmem>>, %arg13: memref<32x512xf32, #tpu.memory_space<vmem>>) attributes {dimension_semantics = [], scalar_prefetch = 0 : i64, scratch_operands = 0 : i64, tpu.core_type = #tpu.core_type<tc>} {
    %c0 = arith.constant 0 : index
    %c0_0 = arith.constant 0 : index
    %0 = vector.load %arg0[%c0, %c0_0] : memref<32x256xf32, #tpu.memory_space<vmem>>, vector<32x256xf32>
    %c0_1 = arith.constant 0 : index
    %c0_2 = arith.constant 0 : index
    %1 = vector.load %arg5[%c0_1, %c0_2] : memref<1x256xf32, #tpu.memory_space<vmem>>, vector<1x256xf32>
    %c0_3 = arith.constant 0 : index
    %c0_4 = arith.constant 0 : index
    %2 = vector.load %arg6[%c0_3, %c0_4] : memref<1x256xf32, #tpu.memory_space<vmem>>, vector<1x256xf32>
    %cst = arith.constant dense<0.000000e+00> : vector<256xf32>
    %3 = vector.multi_reduction <add>, %0, %cst [0] : vector<32x256xf32> to vector<256xf32>
    %4 = vector.shape_cast %3 : vector<256xf32> to vector<1x256xf32>
    %c16_i32 = arith.constant 16 : i32
    %5 = tpu.dynamic_rotate %4 by %c16_i32 dim 1 : vector<1x256xf32>, i32 -> vector<1x256xf32>
    %6 = arith.addf %4, %5 : vector<1x256xf32>
    %c32_i32 = arith.constant 32 : i32
    %7 = tpu.dynamic_rotate %6 by %c32_i32 dim 1 : vector<1x256xf32>, i32 -> vector<1x256xf32>
    %8 = arith.addf %6, %7 : vector<1x256xf32>
    %c64_i32 = arith.constant 64 : i32
    %9 = tpu.dynamic_rotate %8 by %c64_i32 dim 1 : vector<1x256xf32>, i32 -> vector<1x256xf32>
    %10 = arith.addf %8, %9 : vector<1x256xf32>
    %c128_i32 = arith.constant 128 : i32
    %11 = tpu.dynamic_rotate %10 by %c128_i32 dim 1 : vector<1x256xf32>, i32 -> vector<1x256xf32>
    %12 = arith.addf %10, %11 : vector<1x256xf32>
    %13 = arith.mulf %0, %0 : vector<32x256xf32>
    %cst_5 = arith.constant dense<0.000000e+00> : vector<256xf32>
    %14 = vector.multi_reduction <add>, %13, %cst_5 [0] : vector<32x256xf32> to vector<256xf32>
    %15 = vector.shape_cast %14 : vector<256xf32> to vector<1x256xf32>
    %c16_i32_6 = arith.constant 16 : i32
    %16 = tpu.dynamic_rotate %15 by %c16_i32_6 dim 1 : vector<1x256xf32>, i32 -> vector<1x256xf32>
    %17 = arith.addf %15, %16 : vector<1x256xf32>
    %c32_i32_7 = arith.constant 32 : i32
    %18 = tpu.dynamic_rotate %17 by %c32_i32_7 dim 1 : vector<1x256xf32>, i32 -> vector<1x256xf32>
    %19 = arith.addf %17, %18 : vector<1x256xf32>
    %c64_i32_8 = arith.constant 64 : i32
    %20 = tpu.dynamic_rotate %19 by %c64_i32_8 dim 1 : vector<1x256xf32>, i32 -> vector<1x256xf32>
    %21 = arith.addf %19, %20 : vector<1x256xf32>
    %c128_i32_9 = arith.constant 128 : i32
    %22 = tpu.dynamic_rotate %21 by %c128_i32_9 dim 1 : vector<1x256xf32>, i32 -> vector<1x256xf32>
    %23 = arith.addf %21, %22 : vector<1x256xf32>
    %cst_10 = arith.constant 0.001953125 : f32
    %24 = vector.broadcast %cst_10 : f32 to vector<1x256xf32>
    %25 = arith.mulf %12, %24 : vector<1x256xf32>
    %cst_11 = arith.constant 0.001953125 : f32
    %26 = vector.broadcast %cst_11 : f32 to vector<1x256xf32>
    %27 = arith.mulf %23, %26 : vector<1x256xf32>
    %28 = arith.mulf %25, %25 : vector<1x256xf32>
    %29 = arith.subf %27, %28 : vector<1x256xf32>
    %cst_12 = arith.constant 0.000000e+00 : f32
    %30 = vector.broadcast %cst_12 : f32 to vector<1x256xf32>
    %31 = arith.maximumf %29, %30 : vector<1x256xf32>
    %32 = vector.broadcast %25 : vector<1x256xf32> to vector<32x256xf32>
    %33 = arith.subf %0, %32 : vector<32x256xf32>
    %cst_13 = arith.constant 9.99999974E-6 : f32
    %34 = vector.broadcast %cst_13 : f32 to vector<1x256xf32>
    %35 = arith.addf %31, %34 : vector<1x256xf32>
    %36 = math.rsqrt %35 : vector<1x256xf32>
    %37 = vector.broadcast %36 : vector<1x256xf32> to vector<32x256xf32>
    %38 = arith.mulf %33, %37 : vector<32x256xf32>
    %39 = vector.broadcast %1 : vector<1x256xf32> to vector<32x256xf32>
    %40 = arith.mulf %38, %39 : vector<32x256xf32>
    %41 = vector.broadcast %2 : vector<1x256xf32> to vector<32x256xf32>
    %42 = arith.addf %40, %41 : vector<32x256xf32>
    %cst_14 = arith.constant 0.000000e+00 : f32
    %43 = vector.broadcast %cst_14 : f32 to vector<32x256xf32>
    %44 = arith.maximumf %42, %43 : vector<32x256xf32>
    %45 = arith.truncf %44 : vector<32x256xf32> to vector<32x256xbf16>
    %c0_15 = arith.constant 0 : index
    %c0_16 = arith.constant 0 : index
    %46 = vector.load %arg1[%c0_15, %c0_16] : memref<256x128xbf16, #tpu.memory_space<vmem>>, vector<256x128xbf16>
    %cst_17 = arith.constant dense<0.000000e+00> : vector<32x128xf32>
    %47 = tpu.matmul %45, %46, %cst_17 {dimension_numbers = #tpu.dot_dimension_numbers<[1], [0], [0], [1], [0, 0, 1, 1], [], []>} : vector<32x256xbf16>, vector<256x128xbf16>, vector<32x128xf32> -> vector<32x128xf32>
    %c0_18 = arith.constant 0 : index
    %c0_19 = arith.constant 0 : index
    %48 = vector.load %arg7[%c0_18, %c0_19] : memref<1x128xf32, #tpu.memory_space<vmem>>, vector<1x128xf32>
    %c0_20 = arith.constant 0 : index
    %c0_21 = arith.constant 0 : index
    %49 = vector.load %arg8[%c0_20, %c0_21] : memref<1x128xf32, #tpu.memory_space<vmem>>, vector<1x128xf32>
    %cst_22 = arith.constant dense<0.000000e+00> : vector<128xf32>
    %50 = vector.multi_reduction <add>, %47, %cst_22 [0] : vector<32x128xf32> to vector<128xf32>
    %51 = vector.shape_cast %50 : vector<128xf32> to vector<1x128xf32>
    %c8_i32 = arith.constant 8 : i32
    %52 = tpu.dynamic_rotate %51 by %c8_i32 dim 1 : vector<1x128xf32>, i32 -> vector<1x128xf32>
    %53 = arith.addf %51, %52 : vector<1x128xf32>
    %c16_i32_23 = arith.constant 16 : i32
    %54 = tpu.dynamic_rotate %53 by %c16_i32_23 dim 1 : vector<1x128xf32>, i32 -> vector<1x128xf32>
    %55 = arith.addf %53, %54 : vector<1x128xf32>
    %c32_i32_24 = arith.constant 32 : i32
    %56 = tpu.dynamic_rotate %55 by %c32_i32_24 dim 1 : vector<1x128xf32>, i32 -> vector<1x128xf32>
    %57 = arith.addf %55, %56 : vector<1x128xf32>
    %c64_i32_25 = arith.constant 64 : i32
    %58 = tpu.dynamic_rotate %57 by %c64_i32_25 dim 1 : vector<1x128xf32>, i32 -> vector<1x128xf32>
    %59 = arith.addf %57, %58 : vector<1x128xf32>
    %60 = arith.mulf %47, %47 : vector<32x128xf32>
    %cst_26 = arith.constant dense<0.000000e+00> : vector<128xf32>
    %61 = vector.multi_reduction <add>, %60, %cst_26 [0] : vector<32x128xf32> to vector<128xf32>
    %62 = vector.shape_cast %61 : vector<128xf32> to vector<1x128xf32>
    %c8_i32_27 = arith.constant 8 : i32
    %63 = tpu.dynamic_rotate %62 by %c8_i32_27 dim 1 : vector<1x128xf32>, i32 -> vector<1x128xf32>
    %64 = arith.addf %62, %63 : vector<1x128xf32>
    %c16_i32_28 = arith.constant 16 : i32
    %65 = tpu.dynamic_rotate %64 by %c16_i32_28 dim 1 : vector<1x128xf32>, i32 -> vector<1x128xf32>
    %66 = arith.addf %64, %65 : vector<1x128xf32>
    %c32_i32_29 = arith.constant 32 : i32
    %67 = tpu.dynamic_rotate %66 by %c32_i32_29 dim 1 : vector<1x128xf32>, i32 -> vector<1x128xf32>
    %68 = arith.addf %66, %67 : vector<1x128xf32>
    %c64_i32_30 = arith.constant 64 : i32
    %69 = tpu.dynamic_rotate %68 by %c64_i32_30 dim 1 : vector<1x128xf32>, i32 -> vector<1x128xf32>
    %70 = arith.addf %68, %69 : vector<1x128xf32>
    %cst_31 = arith.constant 0.001953125 : f32
    %71 = vector.broadcast %cst_31 : f32 to vector<1x128xf32>
    %72 = arith.mulf %59, %71 : vector<1x128xf32>
    %cst_32 = arith.constant 0.001953125 : f32
    %73 = vector.broadcast %cst_32 : f32 to vector<1x128xf32>
    %74 = arith.mulf %70, %73 : vector<1x128xf32>
    %75 = arith.mulf %72, %72 : vector<1x128xf32>
    %76 = arith.subf %74, %75 : vector<1x128xf32>
    %cst_33 = arith.constant 0.000000e+00 : f32
    %77 = vector.broadcast %cst_33 : f32 to vector<1x128xf32>
    %78 = arith.maximumf %76, %77 : vector<1x128xf32>
    %79 = vector.broadcast %72 : vector<1x128xf32> to vector<32x128xf32>
    %80 = arith.subf %47, %79 : vector<32x128xf32>
    %cst_34 = arith.constant 9.99999974E-6 : f32
    %81 = vector.broadcast %cst_34 : f32 to vector<1x128xf32>
    %82 = arith.addf %78, %81 : vector<1x128xf32>
    %83 = math.rsqrt %82 : vector<1x128xf32>
    %84 = vector.broadcast %83 : vector<1x128xf32> to vector<32x128xf32>
    %85 = arith.mulf %80, %84 : vector<32x128xf32>
    %86 = vector.broadcast %48 : vector<1x128xf32> to vector<32x128xf32>
    %87 = arith.mulf %85, %86 : vector<32x128xf32>
    %88 = vector.broadcast %49 : vector<1x128xf32> to vector<32x128xf32>
    %89 = arith.addf %87, %88 : vector<32x128xf32>
    %cst_35 = arith.constant 0.000000e+00 : f32
    %90 = vector.broadcast %cst_35 : f32 to vector<32x128xf32>
    %91 = arith.maximumf %89, %90 : vector<32x128xf32>
    %92 = tpu.iota {dimensions = array<i32: 0>} : vector<32x1xi32>
    %c16_i32_36 = arith.constant 16 : i32
    %c0_i32 = arith.constant 0 : i32
    %93 = arith.cmpi eq, %c16_i32_36, %c0_i32 : i32
    %c1_i32 = arith.constant 1 : i32
    %94 = arith.select %93, %c1_i32, %c16_i32_36 : i32
    %95 = vector.broadcast %94 : i32 to vector<32x1xi32>
    %96 = arith.remsi %92, %95 : vector<32x1xi32>
    %c0_i32_37 = arith.constant 0 : i32
    %97 = vector.broadcast %c0_i32_37 : i32 to vector<32x1xi32>
    %98 = arith.cmpi ne, %96, %97 : vector<32x1xi32>
    %c0_i32_38 = arith.constant 0 : i32
    %99 = vector.broadcast %c0_i32_38 : i32 to vector<32x1xi32>
    %100 = arith.cmpi slt, %96, %99 : vector<32x1xi32>
    %c0_i32_39 = arith.constant 0 : i32
    %101 = arith.cmpi slt, %94, %c0_i32_39 : i32
    %102 = vector.broadcast %101 : i1 to vector<32x1xi1>
    %103 = vector.broadcast %102 : vector<32x1xi1> to vector<32x1xi1>
    %104 = arith.xori %100, %103 : vector<32x1xi1>
    %105 = arith.andi %104, %98 : vector<32x1xi1>
    %106 = vector.broadcast %94 : i32 to vector<32x1xi32>
    %107 = arith.addi %96, %106 : vector<32x1xi32>
    %108 = arith.select %105, %107, %96 : vector<32x1xi1>, vector<32x1xi32>
    %c0_i32_40 = arith.constant 0 : i32
    %109 = vector.broadcast %c0_i32_40 : i32 to vector<32x1xi32>
    %110 = arith.cmpi ne, %108, %109 : vector<32x1xi32>
    %c1_i32_41 = arith.constant 1 : i32
    %111 = tpu.dynamic_rotate %91 by %c1_i32_41 dim 0 : vector<32x128xf32>, i32 -> vector<32x128xf32>
    %cst_42 = arith.constant 0.000000e+00 : f32
    %112 = vector.shape_cast %110 : vector<32x1xi1> to vector<32x1xi1>
    %113 = vector.broadcast %112 : vector<32x1xi1> to vector<32x128xi1>
    %114 = vector.broadcast %cst_42 : f32 to vector<32x128xf32>
    %115 = arith.select %113, %111, %114 : vector<32x128xi1>, vector<32x128xf32>
    %c15_i32 = arith.constant 15 : i32
    %116 = vector.broadcast %c15_i32 : i32 to vector<32x1xi32>
    %117 = arith.cmpi ne, %108, %116 : vector<32x1xi32>
    %c31_i32 = arith.constant 31 : i32
    %118 = tpu.dynamic_rotate %91 by %c31_i32 dim 0 : vector<32x128xf32>, i32 -> vector<32x128xf32>
    %cst_43 = arith.constant 0.000000e+00 : f32
    %119 = vector.shape_cast %117 : vector<32x1xi1> to vector<32x1xi1>
    %120 = vector.broadcast %119 : vector<32x1xi1> to vector<32x128xi1>
    %121 = vector.broadcast %cst_43 : f32 to vector<32x128xf32>
    %122 = arith.select %120, %118, %121 : vector<32x128xi1>, vector<32x128xf32>
    %123 = tpu.concatenate %115, %91, %122 in 1 : vector<32x128xf32>, vector<32x128xf32>, vector<32x128xf32> -> vector<32x384xf32>
    %124 = arith.truncf %123 : vector<32x384xf32> to vector<32x384xbf16>
    %c0_44 = arith.constant 0 : index
    %c0_45 = arith.constant 0 : index
    %125 = vector.load %arg2[%c0_44, %c0_45] : memref<384x128xbf16, #tpu.memory_space<vmem>>, vector<384x128xbf16>
    %cst_46 = arith.constant dense<0.000000e+00> : vector<32x128xf32>
    %126 = tpu.matmul %124, %125, %cst_46 {dimension_numbers = #tpu.dot_dimension_numbers<[1], [0], [0], [1], [0, 0, 1, 1], [], []>} : vector<32x384xbf16>, vector<384x128xbf16>, vector<32x128xf32> -> vector<32x128xf32>
    %c0_47 = arith.constant 0 : index
    %c0_48 = arith.constant 0 : index
    %127 = vector.load %arg9[%c0_47, %c0_48] : memref<1x128xf32, #tpu.memory_space<vmem>>, vector<1x128xf32>
    %c0_49 = arith.constant 0 : index
    %c0_50 = arith.constant 0 : index
    %128 = vector.load %arg10[%c0_49, %c0_50] : memref<1x128xf32, #tpu.memory_space<vmem>>, vector<1x128xf32>
    %cst_51 = arith.constant dense<0.000000e+00> : vector<128xf32>
    %129 = vector.multi_reduction <add>, %126, %cst_51 [0] : vector<32x128xf32> to vector<128xf32>
    %130 = vector.shape_cast %129 : vector<128xf32> to vector<1x128xf32>
    %c8_i32_52 = arith.constant 8 : i32
    %131 = tpu.dynamic_rotate %130 by %c8_i32_52 dim 1 : vector<1x128xf32>, i32 -> vector<1x128xf32>
    %132 = arith.addf %130, %131 : vector<1x128xf32>
    %c16_i32_53 = arith.constant 16 : i32
    %133 = tpu.dynamic_rotate %132 by %c16_i32_53 dim 1 : vector<1x128xf32>, i32 -> vector<1x128xf32>
    %134 = arith.addf %132, %133 : vector<1x128xf32>
    %c32_i32_54 = arith.constant 32 : i32
    %135 = tpu.dynamic_rotate %134 by %c32_i32_54 dim 1 : vector<1x128xf32>, i32 -> vector<1x128xf32>
    %136 = arith.addf %134, %135 : vector<1x128xf32>
    %c64_i32_55 = arith.constant 64 : i32
    %137 = tpu.dynamic_rotate %136 by %c64_i32_55 dim 1 : vector<1x128xf32>, i32 -> vector<1x128xf32>
    %138 = arith.addf %136, %137 : vector<1x128xf32>
    %139 = arith.mulf %126, %126 : vector<32x128xf32>
    %cst_56 = arith.constant dense<0.000000e+00> : vector<128xf32>
    %140 = vector.multi_reduction <add>, %139, %cst_56 [0] : vector<32x128xf32> to vector<128xf32>
    %141 = vector.shape_cast %140 : vector<128xf32> to vector<1x128xf32>
    %c8_i32_57 = arith.constant 8 : i32
    %142 = tpu.dynamic_rotate %141 by %c8_i32_57 dim 1 : vector<1x128xf32>, i32 -> vector<1x128xf32>
    %143 = arith.addf %141, %142 : vector<1x128xf32>
    %c16_i32_58 = arith.constant 16 : i32
    %144 = tpu.dynamic_rotate %143 by %c16_i32_58 dim 1 : vector<1x128xf32>, i32 -> vector<1x128xf32>
    %145 = arith.addf %143, %144 : vector<1x128xf32>
    %c32_i32_59 = arith.constant 32 : i32
    %146 = tpu.dynamic_rotate %145 by %c32_i32_59 dim 1 : vector<1x128xf32>, i32 -> vector<1x128xf32>
    %147 = arith.addf %145, %146 : vector<1x128xf32>
    %c64_i32_60 = arith.constant 64 : i32
    %148 = tpu.dynamic_rotate %147 by %c64_i32_60 dim 1 : vector<1x128xf32>, i32 -> vector<1x128xf32>
    %149 = arith.addf %147, %148 : vector<1x128xf32>
    %cst_61 = arith.constant 0.001953125 : f32
    %150 = vector.broadcast %cst_61 : f32 to vector<1x128xf32>
    %151 = arith.mulf %138, %150 : vector<1x128xf32>
    %cst_62 = arith.constant 0.001953125 : f32
    %152 = vector.broadcast %cst_62 : f32 to vector<1x128xf32>
    %153 = arith.mulf %149, %152 : vector<1x128xf32>
    %154 = arith.mulf %151, %151 : vector<1x128xf32>
    %155 = arith.subf %153, %154 : vector<1x128xf32>
    %cst_63 = arith.constant 0.000000e+00 : f32
    %156 = vector.broadcast %cst_63 : f32 to vector<1x128xf32>
    %157 = arith.maximumf %155, %156 : vector<1x128xf32>
    %158 = vector.broadcast %151 : vector<1x128xf32> to vector<32x128xf32>
    %159 = arith.subf %126, %158 : vector<32x128xf32>
    %cst_64 = arith.constant 9.99999974E-6 : f32
    %160 = vector.broadcast %cst_64 : f32 to vector<1x128xf32>
    %161 = arith.addf %157, %160 : vector<1x128xf32>
    %162 = math.rsqrt %161 : vector<1x128xf32>
    %163 = vector.broadcast %162 : vector<1x128xf32> to vector<32x128xf32>
    %164 = arith.mulf %159, %163 : vector<32x128xf32>
    %165 = vector.broadcast %127 : vector<1x128xf32> to vector<32x128xf32>
    %166 = arith.mulf %164, %165 : vector<32x128xf32>
    %167 = vector.broadcast %128 : vector<1x128xf32> to vector<32x128xf32>
    %168 = arith.addf %166, %167 : vector<32x128xf32>
    %cst_65 = arith.constant 0.000000e+00 : f32
    %169 = vector.broadcast %cst_65 : f32 to vector<32x128xf32>
    %170 = arith.maximumf %168, %169 : vector<32x128xf32>
    %171 = arith.truncf %170 : vector<32x128xf32> to vector<32x128xbf16>
    %c0_66 = arith.constant 0 : index
    %c0_67 = arith.constant 0 : index
    %172 = vector.load %arg3[%c0_66, %c0_67] : memref<128x512xbf16, #tpu.memory_space<vmem>>, vector<128x512xbf16>
    %cst_68 = arith.constant dense<0.000000e+00> : vector<32x512xf32>
    %173 = tpu.matmul %171, %172, %cst_68 {dimension_numbers = #tpu.dot_dimension_numbers<[1], [0], [0], [1], [0, 0, 1, 1], [], []>} : vector<32x128xbf16>, vector<128x512xbf16>, vector<32x512xf32> -> vector<32x512xf32>
    %174 = arith.truncf %0 : vector<32x256xf32> to vector<32x256xbf16>
    %c0_69 = arith.constant 0 : index
    %c0_70 = arith.constant 0 : index
    %175 = vector.load %arg4[%c0_69, %c0_70] : memref<256x512xbf16, #tpu.memory_space<vmem>>, vector<256x512xbf16>
    %cst_71 = arith.constant dense<0.000000e+00> : vector<32x512xf32>
    %176 = tpu.matmul %174, %175, %cst_71 {dimension_numbers = #tpu.dot_dimension_numbers<[1], [0], [0], [1], [0, 0, 1, 1], [], []>} : vector<32x256xbf16>, vector<256x512xbf16>, vector<32x512xf32> -> vector<32x512xf32>
    %c0_72 = arith.constant 0 : index
    %c0_73 = arith.constant 0 : index
    %177 = vector.load %arg11[%c0_72, %c0_73] : memref<1x512xf32, #tpu.memory_space<vmem>>, vector<1x512xf32>
    %c0_74 = arith.constant 0 : index
    %c0_75 = arith.constant 0 : index
    %178 = vector.load %arg12[%c0_74, %c0_75] : memref<1x512xf32, #tpu.memory_space<vmem>>, vector<1x512xf32>
    %cst_76 = arith.constant dense<0.000000e+00> : vector<512xf32>
    %179 = vector.multi_reduction <add>, %176, %cst_76 [0] : vector<32x512xf32> to vector<512xf32>
    %180 = vector.shape_cast %179 : vector<512xf32> to vector<1x512xf32>
    %c32_i32_77 = arith.constant 32 : i32
    %181 = tpu.dynamic_rotate %180 by %c32_i32_77 dim 1 : vector<1x512xf32>, i32 -> vector<1x512xf32>
    %182 = arith.addf %180, %181 : vector<1x512xf32>
    %c64_i32_78 = arith.constant 64 : i32
    %183 = tpu.dynamic_rotate %182 by %c64_i32_78 dim 1 : vector<1x512xf32>, i32 -> vector<1x512xf32>
    %184 = arith.addf %182, %183 : vector<1x512xf32>
    %c128_i32_79 = arith.constant 128 : i32
    %185 = tpu.dynamic_rotate %184 by %c128_i32_79 dim 1 : vector<1x512xf32>, i32 -> vector<1x512xf32>
    %186 = arith.addf %184, %185 : vector<1x512xf32>
    %c256_i32 = arith.constant 256 : i32
    %187 = tpu.dynamic_rotate %186 by %c256_i32 dim 1 : vector<1x512xf32>, i32 -> vector<1x512xf32>
    %188 = arith.addf %186, %187 : vector<1x512xf32>
    %189 = arith.mulf %176, %176 : vector<32x512xf32>
    %cst_80 = arith.constant dense<0.000000e+00> : vector<512xf32>
    %190 = vector.multi_reduction <add>, %189, %cst_80 [0] : vector<32x512xf32> to vector<512xf32>
    %191 = vector.shape_cast %190 : vector<512xf32> to vector<1x512xf32>
    %c32_i32_81 = arith.constant 32 : i32
    %192 = tpu.dynamic_rotate %191 by %c32_i32_81 dim 1 : vector<1x512xf32>, i32 -> vector<1x512xf32>
    %193 = arith.addf %191, %192 : vector<1x512xf32>
    %c64_i32_82 = arith.constant 64 : i32
    %194 = tpu.dynamic_rotate %193 by %c64_i32_82 dim 1 : vector<1x512xf32>, i32 -> vector<1x512xf32>
    %195 = arith.addf %193, %194 : vector<1x512xf32>
    %c128_i32_83 = arith.constant 128 : i32
    %196 = tpu.dynamic_rotate %195 by %c128_i32_83 dim 1 : vector<1x512xf32>, i32 -> vector<1x512xf32>
    %197 = arith.addf %195, %196 : vector<1x512xf32>
    %c256_i32_84 = arith.constant 256 : i32
    %198 = tpu.dynamic_rotate %197 by %c256_i32_84 dim 1 : vector<1x512xf32>, i32 -> vector<1x512xf32>
    %199 = arith.addf %197, %198 : vector<1x512xf32>
    %cst_85 = arith.constant 0.001953125 : f32
    %200 = vector.broadcast %cst_85 : f32 to vector<1x512xf32>
    %201 = arith.mulf %188, %200 : vector<1x512xf32>
    %cst_86 = arith.constant 0.001953125 : f32
    %202 = vector.broadcast %cst_86 : f32 to vector<1x512xf32>
    %203 = arith.mulf %199, %202 : vector<1x512xf32>
    %204 = arith.mulf %201, %201 : vector<1x512xf32>
    %205 = arith.subf %203, %204 : vector<1x512xf32>
    %cst_87 = arith.constant 0.000000e+00 : f32
    %206 = vector.broadcast %cst_87 : f32 to vector<1x512xf32>
    %207 = arith.maximumf %205, %206 : vector<1x512xf32>
    %208 = vector.broadcast %201 : vector<1x512xf32> to vector<32x512xf32>
    %209 = arith.subf %176, %208 : vector<32x512xf32>
    %cst_88 = arith.constant 9.99999974E-6 : f32
    %210 = vector.broadcast %cst_88 : f32 to vector<1x512xf32>
    %211 = arith.addf %207, %210 : vector<1x512xf32>
    %212 = math.rsqrt %211 : vector<1x512xf32>
    %213 = vector.broadcast %212 : vector<1x512xf32> to vector<32x512xf32>
    %214 = arith.mulf %209, %213 : vector<32x512xf32>
    %215 = vector.broadcast %177 : vector<1x512xf32> to vector<32x512xf32>
    %216 = arith.mulf %214, %215 : vector<32x512xf32>
    %217 = vector.broadcast %178 : vector<1x512xf32> to vector<32x512xf32>
    %218 = arith.addf %216, %217 : vector<32x512xf32>
    %219 = arith.addf %173, %218 : vector<32x512xf32>
    %c0_89 = arith.constant 0 : index
    %c0_90 = arith.constant 0 : index
    %220 = vector.load %arg13[%c0_89, %c0_90] : memref<32x512xf32, #tpu.memory_space<vmem>>, vector<32x512xf32>
    tpu.vector_store %arg13[%c0_89, %c0_90], %219 {strides = array<i32>} : memref<32x512xf32, #tpu.memory_space<vmem>>, vector<32x512xf32>,
    return
  }
}

</mosaic_0001>

<llo_original>
// kernel: bottleneck_forward.1
$region0: #{bottleneck_forward.1}
  #allocation0 [shape = 'u32[]', space=smem, size = 0x4, offset = 0x4, fixed_abs, tag = 'smem constant byte address 0x4 - core index']
  #allocation1 [shape = 'u32[144,128]{1,0:T(1,128)}', space=vmem, size = 0x12000, scoped, tag = 'internal scratch']
  %s0 = inlined_call_operand.vmem [shape: f32[32,256], index: 0, kind: input, shape index: {}]
  %s1 = inlined_call_operand.vmem [shape: bf16[256,128], index: 1, kind: input, shape index: {}]
  %s2 = inlined_call_operand.vmem [shape: bf16[384,128], index: 2, kind: input, shape index: {}]
  %s3 = inlined_call_operand.vmem [shape: bf16[128,512], index: 3, kind: input, shape index: {}]
  %s4 = inlined_call_operand.vmem [shape: bf16[256,512], index: 4, kind: input, shape index: {}]
  %s5 = inlined_call_operand.vmem [shape: f32[1,256], index: 5, kind: input, shape index: {}]
  %s6 = inlined_call_operand.vmem [shape: f32[1,256], index: 6, kind: input, shape index: {}]
  %s7 = inlined_call_operand.vmem [shape: f32[1,128], index: 7, kind: input, shape index: {}]
  %s8 = inlined_call_operand.vmem [shape: f32[1,128], index: 8, kind: input, shape index: {}]
  %s9 = inlined_call_operand.vmem [shape: f32[1,128], index: 9, kind: input, shape index: {}]
  %s10 = inlined_call_operand.vmem [shape: f32[1,128], index: 10, kind: input, shape index: {}]
  %s11 = inlined_call_operand.vmem [shape: f32[1,512], index: 11, kind: input, shape index: {}]
  %s12 = inlined_call_operand.vmem [shape: f32[1,512], index: 12, kind: input, shape index: {}]
  %s13 = inlined_call_operand.vmem [shape: f32[32,512], index: 13, kind: output, shape index: {}]
  %s14 = sld [smem:[#allocation0]]
  $region62: #{bottleneck_forward.1} parent=0
    _
  %s16 = ssub.s32 1, %s14
  %s17 = scalar_select 0, %s16, %s14
  // Predicated region
  $region2: #{bottleneck_forward.1} parent=0 // pred_check
    _
  $region3: #{bottleneck_forward.1} parent=0 // pred_check_branch
    %19 = sbr.rel (0) target = $region5
  $region4: #{bottleneck_forward.1} parent=0 // pred_region
    _
  $region5: #{bottleneck_forward.1} parent=0 // pred_fallthru
    _
  // Predicated region
  $region6: #{bottleneck_forward.1} parent=0 // pred_check
    _
  $region7: #{bottleneck_forward.1} parent=0 // pred_check_branch
    %21 = sbr.rel (0) target = $region9
  $region8: #{bottleneck_forward.1} parent=0 // pred_region
    _
  $region9: #{bottleneck_forward.1} parent=0 // pred_fallthru
    _
  // Predicated region
  $region10: #{bottleneck_forward.1} parent=0 // pred_check
    _
  $region11: #{bottleneck_forward.1} parent=0 // pred_check_branch
    %23 = sbr.rel (0) target = $region13
  $region12: #{bottleneck_forward.1} parent=0 // pred_region
    _
  $region13: #{bottleneck_forward.1} parent=0 // pred_fallthru
    _
  // Predicated region
  $region14: #{bottleneck_forward.1} parent=0 // pred_check
    _
  $region15: #{bottleneck_forward.1} parent=0 // pred_check_branch
    %25 = sbr.rel (0) target = $region17
  $region16: #{bottleneck_forward.1} parent=0 // pred_region
    _
  $region17: #{bottleneck_forward.1} parent=0 // pred_fallthru
    _
  // Predicated region
  $region18: #{bottleneck_forward.1} parent=0 // pred_check
    _
  $region19: #{bottleneck_forward.1} parent=0 // pred_check_branch
    %27 = sbr.rel (0) target = $region21
  $region20: #{bottleneck_forward.1} parent=0 // pred_region
    _
  $region21: #{bottleneck_forward.1} parent=0 // pred_fallthru
    _
  // Predicated region
  $region22: #{bottleneck_forward.1} parent=0 // pred_check
    _
  $region23: #{bottleneck_forward.1} parent=0 // pred_check_branch
    %29 = sbr.rel (0) target = $region25
  $region24: #{bottleneck_forward.1} parent=0 // pred_region
    _
  $region25: #{bottleneck_forward.1} parent=0 // pred_fallthru
    _
  // Predicated region
  $region26: #{bottleneck_forward.1} parent=0 // pred_check
    _
  $region27: #{bottleneck_forward.1} parent=0 // pred_check_branch
    %31 = sbr.rel (0) target = $region29
  $region28: #{bottleneck_forward.1} parent=0 // pred_region
    _
  $region29: #{bottleneck_forward.1} parent=0 // pred_fallthru
    _
  // Predicated region
  $region30: #{bottleneck_forward.1} parent=0 // pred_check
    _
  $region31: #{bottleneck_forward.1} parent=0 // pred_check_branch
    %33 = sbr.rel (0) target = $region33
  $region32: #{bottleneck_forward.1} parent=0 // pred_region
    _
  $region33: #{bottleneck_forward.1} parent=0 // pred_fallthru
    _
  // Predicated region
  $region34: #{bottleneck_forward.1} parent=0 // pred_check
    _
  $region35: #{bottleneck_forward.1} parent=0 // pred_check_branch
    %35 = sbr.rel (0) target = $region37
  $region36: #{bottleneck_forward.1} parent=0 // pred_region
    _
  $region37: #{bottleneck_forward.1} parent=0 // pred_fallthru
    _
  // Predicated region
  $region38: #{bottleneck_forward.1} parent=0 // pred_check
    _
  $region39: #{bottleneck_forward.1} parent=0 // pred_check_branch
    %37 = sbr.rel (0) target = $region41
  $region40: #{bottleneck_forward.1} parent=0 // pred_region
    _
  $region41: #{bottleneck_forward.1} parent=0 // pred_fallthru
    _
  // Predicated region
  $region42: #{bottleneck_forward.1} parent=0 // pred_check
    _
  $region43: #{bottleneck_forward.1} parent=0 // pred_check_branch
    %39 = sbr.rel (0) target = $region45
  $region44: #{bottleneck_forward.1} parent=0 // pred_region
    _
  $region45: #{bottleneck_forward.1} parent=0 // pred_fallthru
    _
  // Predicated region
  $region46: #{bottleneck_forward.1} parent=0 // pred_check
    _
  $region47: #{bottleneck_forward.1} parent=0 // pred_check_branch
    %41 = sbr.rel (0) target = $region49
  $region48: #{bottleneck_forward.1} parent=0 // pred_region
    _
  $region49: #{bottleneck_forward.1} parent=0 // pred_fallthru
    _
  // Predicated region
  $region50: #{bottleneck_forward.1} parent=0 // pred_check
    _
  $region51: #{bottleneck_forward.1} parent=0 // pred_check_branch
    %43 = sbr.rel (0) target = $region53
  $region52: #{bottleneck_forward.1} parent=0 // pred_region
    _
  $region53: #{bottleneck_forward.1} parent=0 // pred_fallthru
    _
  %v45 = vld [vmem:[%s0] sm:$0xff]
  %v46 = vld [vmem:[%s0 + $0x8] sm:$0xff]
  %v47 = vld [vmem:[%s0 + $0x10] sm:$0xff]
  %v48 = vld [vmem:[%s0 + $0x18] sm:$0xff]
  %v49 = vld [vmem:[%s0 + $0x20] sm:$0xff]
  %v50 = vld [vmem:[%s0 + $0x28] sm:$0xff]
  %v51 = vld [vmem:[%s0 + $0x30] sm:$0xff]
  %v52 = vld [vmem:[%s0 + $0x38] sm:$0xff]
  %v53 = vld [vmem:[%s5] sm:$0x3]
  %v54 = vld [vmem:[%s6] sm:$0x3]
  %v55 = vadd.f32 %v45, %v47
  %v56 = vadd.f32 %v55, %v49
  %v57 = vadd.f32 %v56, %v51
  %v58 = vrot.slane %v57, 4
  %v59 = vadd.f32 %v57, %v58
  %v60 = vrot.slane %v59, 2
  %v61 = vadd.f32 %v59, %v60
  %v62 = vrot.slane %v61, 1
  %v63 = vadd.f32 %v61, %v62
  %v64 = vadd.f32 %v46, %v48
  %v65 = vadd.f32 %v64, %v50
  %v66 = vadd.f32 %v65, %v52
  %v67 = vrot.slane %v66, 4
  %v68 = vadd.f32 %v66, %v67
  %v69 = vrot.slane %v68, 2
  %v70 = vadd.f32 %v68, %v69
  %v71 = vrot.slane %v70, 1
  %v72 = vadd.f32 %v70, %v71
  %73 = vrot.lane.b32.xlu0 %v63, 16
  %v74 = vpop.permute.xlu0 %73
  %75 = vrot.lane.b32.xlu0 %v72, 16
  %v76 = vpop.permute.xlu0 %75
  %v77 = vlaneseq
  %v78 = vand.u32 %v77, 127
  %vm79 = vcmp.lt.s32.totalorder %v78, 16
  %v80 = vsel %vm79, %v74, %v76
  %v81 = vsel %vm79, %v76, %v74
  %v82 = vadd.f32 %v63, %v81
  %v83 = vadd.f32 %v72, %v80
  %84 = vrot.lane.b32.xlu0 %v82, 32
  %v85 = vpop.permute.xlu0 %84
  %86 = vrot.lane.b32.xlu0 %v83, 32
  %v87 = vpop.permute.xlu0 %86
  %vm88 = vcmp.lt.s32.totalorder %v78, 32
  %v89 = vsel %vm88, %v85, %v87
  %v90 = vsel %vm88, %v87, %v85
  %v91 = vadd.f32 %v82, %v90
  %v92 = vadd.f32 %v83, %v89
  %93 = vrot.lane.b32.xlu0 %v91, 64
  %v94 = vpop.permute.xlu0 %93
  %95 = vrot.lane.b32.xlu0 %v92, 64
  %v96 = vpop.permute.xlu0 %95
  %vm97 = vcmp.lt.s32.totalorder %v78, 64
  %v98 = vsel %vm97, %v94, %v96
  %v99 = vsel %vm97, %v96, %v94
  %v100 = vadd.f32 %v91, %v99
  %v101 = vadd.f32 %v92, %v98
  %v102 = vadd.f32 %v100, %v101
  %v103 = vmul.f32 %v45, %v45
  %v104 = vmul.f32 %v46, %v46
  %v105 = vmul.f32 %v47, %v47
  %v106 = vmul.f32 %v48, %v48
  %v107 = vmul.f32 %v49, %v49
  %v108 = vmul.f32 %v50, %v50
  %v109 = vmul.f32 %v51, %v51
  %v110 = vmul.f32 %v52, %v52
  %v111 = vadd.f32 %v103, %v105
  %v112 = vadd.f32 %v111, %v107
  %v113 = vadd.f32 %v112, %v109
  %v114 = vrot.slane %v113, 4
  %v115 = vadd.f32 %v113, %v114
  %v116 = vrot.slane %v115, 2
  %v117 = vadd.f32 %v115, %v116
  %v118 = vrot.slane %v117, 1
  %v119 = vadd.f32 %v117, %v118
  %v120 = vadd.f32 %v104, %v106
  %v121 = vadd.f32 %v120, %v108
  %v122 = vadd.f32 %v121, %v110
  %v123 = vrot.slane %v122, 4
  %v124 = vadd.f32 %v122, %v123
  %v125 = vrot.slane %v124, 2
  %v126 = vadd.f32 %v124, %v125
  %v127 = vrot.slane %v126, 1
  %v128 = vadd.f32 %v126, %v127
  %129 = vrot.lane.b32.xlu0 %v119, 16
  %v130 = vpop.permute.xlu0 %129
  %131 = vrot.lane.b32.xlu0 %v128, 16
  %v132 = vpop.permute.xlu0 %131
  %v133 = vsel %vm79, %v130, %v132
  %v134 = vsel %vm79, %v132, %v130
  %v135 = vadd.f32 %v119, %v134
  %v136 = vadd.f32 %v128, %v133
  %137 = vrot.lane.b32.xlu0 %v135, 32
  %v138 = vpop.permute.xlu0 %137
  %139 = vrot.lane.b32.xlu0 %v136, 32
  %v140 = vpop.permute.xlu0 %139
  %v141 = vsel %vm88, %v138, %v140
  %v142 = vsel %vm88, %v140, %v138
  %v143 = vadd.f32 %v135, %v142
  %v144 = vadd.f32 %v136, %v141
  %145 = vrot.lane.b32.xlu0 %v143, 64
  %v146 = vpop.permute.xlu0 %145
  %147 = vrot.lane.b32.xlu0 %v144, 64
  %v148 = vpop.permute.xlu0 %147
  %v149 = vsel %vm97, %v146, %v148
  %v150 = vsel %vm97, %v148, %v146
  %v151 = vadd.f32 %v143, %v150
  %v152 = vadd.f32 %v144, %v149
  %v153 = vadd.f32 %v151, %v152
  %v154 = vmul.f32 %v102, 0.001953125
  %v155 = vmul.f32 %v153, 0.001953125
  %v156 = vmul.f32 %v154, %v154
  %v157 = vsub.f32 %v155, %v156
  %v158 = vmax.f32 %v157, 0.0
  %v159 = vlaneseq
  %v160 = vshrl.u32 %v159, 7
  %v161 = vsub.s32 0, %v160
  %v162 = vrot.slane %v154, %v161
  %v163 = vsub.f32 %v45, %v162
  %v164 = vsub.f32 %v46, %v162
  %v165 = vsub.f32 %v47, %v162
  %v166 = vsub.f32 %v48, %v162
  %v167 = vsub.f32 %v49, %v162
  %v168 = vsub.f32 %v50, %v162
  %v169 = vsub.f32 %v51, %v162
  %v170 = vsub.f32 %v52, %v162
  %v171 = vadd.f32 %v158, 1e-05
  %v172 = vrsqrt.pop %v171
  %v173 = vlaneseq
  %v174 = vshrl.u32 %v173, 7
  %v175 = vsub.s32 0, %v174
  %v176 = vrot.slane %v172, %v175
  %v177 = vmul.f32 %v163, %v176
  %v178 = vmul.f32 %v164, %v176
  %v179 = vmul.f32 %v165, %v176
  %v180 = vmul.f32 %v166, %v176
  %v181 = vmul.f32 %v167, %v176
  %v182 = vmul.f32 %v168, %v176
  %v183 = vmul.f32 %v169, %v176
  %v184 = vmul.f32 %v170, %v176
  %v186 = vlaneseq
  %v187 = vshrl.u32 %v186, 7
  %v188 = vsub.s32 0, %v187
  %v189 = vrot.slane %v53, %v188
  %v190 = vlaneseq
  %v191 = vshrl.u32 %v190, 7
  %v192 = vsub.s32 1, %v191
  %v193 = vrot.slane %v53, %v192
  %v196 = vmul.f32 %v177, %v189
  %v197 = vmul.f32 %v178, %v193
  %v198 = vmul.f32 %v179, %v189
  %v199 = vmul.f32 %v180, %v193
  %v200 = vmul.f32 %v181, %v189
  %v201 = vmul.f32 %v182, %v193
  %v202 = vmul.f32 %v183, %v189
  %v203 = vmul.f32 %v184, %v193
  %v205 = vlaneseq
  %v206 = vshrl.u32 %v205, 7
  %v207 = vsub.s32 0, %v206
  %v208 = vrot.slane %v54, %v207
  %v209 = vlaneseq
  %v210 = vshrl.u32 %v209, 7
  %v211 = vsub.s32 1, %v210
  %v212 = vrot.slane %v54, %v211
  %v215 = vadd.f32 %v196, %v208
  %v216 = vadd.f32 %v197, %v212
  %v217 = vadd.f32 %v198, %v208
  %v218 = vadd.f32 %v199, %v212
  %v219 = vadd.f32 %v200, %v208
  %v220 = vadd.f32 %v201, %v212
  %v221 = vadd.f32 %v202, %v208
  %v222 = vadd.f32 %v203, %v212
  %v223 = vmax.f32 %v215, 0.0
  %v224 = vmax.f32 %v216, 0.0
  %v225 = vmax.f32 %v217, 0.0
  %v226 = vmax.f32 %v218, 0.0
  %v227 = vmax.f32 %v219, 0.0
  %v228 = vmax.f32 %v220, 0.0
  %v229 = vmax.f32 %v221, 0.0
  %v230 = vmax.f32 %v222, 0.0
  %v231 = vpack.c.bf16 %v225, %v223
  %v232 = vpack.c.bf16 %v226, %v224
  %v233 = vpack.c.bf16 %v229, %v227
  %v234 = vpack.c.bf16 %v230, %v228
  %v235 = vld [vmem:[%s1] sm:$0xf]
  %v236 = vld [vmem:[%s1 + $0x4] sm:$0xf]
  %v237 = vld [vmem:[%s1 + $0x8] sm:$0xf]
  %v238 = vld [vmem:[%s1 + $0xc] sm:$0xf]
  %v239 = vld [vmem:[%s1 + $0x10] sm:$0xf]
  %v240 = vld [vmem:[%s1 + $0x14] sm:$0xf]
  %v241 = vld [vmem:[%s1 + $0x18] sm:$0xf]
  %v242 = vld [vmem:[%s1 + $0x1c] sm:$0xf]
  %v243 = vld [vmem:[%s1 + $0x20] sm:$0xf]
  %v244 = vld [vmem:[%s1 + $0x24] sm:$0xf]
  %v245 = vld [vmem:[%s1 + $0x28] sm:$0xf]
  %v246 = vld [vmem:[%s1 + $0x2c] sm:$0xf]
  %v247 = vld [vmem:[%s1 + $0x30] sm:$0xf]
  %v248 = vld [vmem:[%s1 + $0x34] sm:$0xf]
  %v249 = vld [vmem:[%s1 + $0x38] sm:$0xf]
  %v250 = vld [vmem:[%s1 + $0x3c] sm:$0xf]
  %v251 = vld [vmem:[%s1 + $0x40] sm:$0xf]
  %v252 = vld [vmem:[%s1 + $0x44] sm:$0xf]
  %v253 = vld [vmem:[%s1 + $0x48] sm:$0xf]
  %v254 = vld [vmem:[%s1 + $0x4c] sm:$0xf]
  %v255 = vld [vmem:[%s1 + $0x50] sm:$0xf]
  %v256 = vld [vmem:[%s1 + $0x54] sm:$0xf]
  %v257 = vld [vmem:[%s1 + $0x58] sm:$0xf]
  %v258 = vld [vmem:[%s1 + $0x5c] sm:$0xf]
  %v259 = vld [vmem:[%s1 + $0x60] sm:$0xf]
  %v260 = vld [vmem:[%s1 + $0x64] sm:$0xf]
  %v261 = vld [vmem:[%s1 + $0x68] sm:$0xf]
  %v262 = vld [vmem:[%s1 + $0x6c] sm:$0xf]
  %v263 = vld [vmem:[%s1 + $0x70] sm:$0xf]
  %v264 = vld [vmem:[%s1 + $0x74] sm:$0xf]
  %v265 = vld [vmem:[%s1 + $0x78] sm:$0xf]
  %v266 = vld [vmem:[%s1 + $0x7c] sm:$0xf]
  %v299 = vunpack.c.l.b16 %v235
  %v300 = vunpack.c.l.b16 %v236
  %v301 = vunpack.c.l.b16 %v237
  %v302 = vunpack.c.l.b16 %v238
  %v303 = vunpack.c.l.b16 %v239
  %v304 = vunpack.c.l.b16 %v240
  %v305 = vunpack.c.l.b16 %v241
  %v306 = vunpack.c.l.b16 %v242
  %v307 = vunpack.c.l.b16 %v243
  %v308 = vunpack.c.l.b16 %v244
  %v309 = vunpack.c.l.b16 %v245
  %v310 = vunpack.c.l.b16 %v246
  %v311 = vunpack.c.l.b16 %v247
  %v312 = vunpack.c.l.b16 %v248
  %v313 = vunpack.c.l.b16 %v249
  %v314 = vunpack.c.l.b16 %v250
  %v315 = vunpack.c.l.b16 %v251
  %v316 = vunpack.c.l.b16 %v252
  %v317 = vunpack.c.l.b16 %v253
  %v318 = vunpack.c.l.b16 %v254
  %v319 = vunpack.c.l.b16 %v255
  %v320 = vunpack.c.l.b16 %v256
  %v321 = vunpack.c.l.b16 %v257
  %v322 = vunpack.c.l.b16 %v258
  %v323 = vunpack.c.l.b16 %v259
  %v324 = vunpack.c.l.b16 %v260
  %v325 = vunpack.c.l.b16 %v261
  %v326 = vunpack.c.l.b16 %v262
  %v327 = vunpack.c.l.b16 %v263
  %v328 = vunpack.c.l.b16 %v264
  %v329 = vunpack.c.l.b16 %v265
  %v330 = vunpack.c.l.b16 %v266
  %v331 = vpack.c.b16 %v300, %v299
  %v332 = vpack.c.b16 %v302, %v301
  %v333 = vpack.c.b16 %v304, %v303
  %v334 = vpack.c.b16 %v306, %v305
  %v335 = vpack.c.b16 %v308, %v307
  %v336 = vpack.c.b16 %v310, %v309
  %v337 = vpack.c.b16 %v312, %v311
  %v338 = vpack.c.b16 %v314, %v313
  %v339 = vpack.c.b16 %v316, %v315
  %v340 = vpack.c.b16 %v318, %v317
  %v341 = vpack.c.b16 %v320, %v319
  %v342 = vpack.c.b16 %v322, %v321
  %v343 = vpack.c.b16 %v324, %v323
  %v344 = vpack.c.b16 %v326, %v325
  %v345 = vpack.c.b16 %v328, %v327
  %v346 = vpack.c.b16 %v330, %v329
  %363 = vmatprep.subr.bf16.mxu0 0
  %364 = vmatpush1.bf16.msra.mxu0 %v331
  %365 = vmatprep.subr.bf16.mxu0 0
  %366 = vmatpush1.bf16.msra.mxu0 %v332
  %367 = vmatprep.subr.bf16.mxu0 0
  %368 = vmatpush1.bf16.msra.mxu0 %v333
  %369 = vmatprep.subr.bf16.mxu0 0
  %370 = vmatpush1.bf16.msra.mxu0 %v334
  %371 = vmatprep.subr.bf16.mxu0 0
  %372 = vmatpush1.bf16.msra.mxu0 %v335
  %373 = vmatprep.subr.bf16.mxu0 0
  %374 = vmatpush1.bf16.msra.mxu0 %v336
  %375 = vmatprep.subr.bf16.mxu0 0
  %376 = vmatpush1.bf16.msra.mxu0 %v337
  %377 = vmatprep.subr.bf16.mxu0 0
  %378 = vmatpush1.bf16.msra.mxu0 %v338
  %379 = vmatprep.subr.bf16.mxu0 0
  %380 = vmatpush1.bf16.msra.mxu0 %v339
  %381 = vmatprep.subr.bf16.mxu0 0
  %382 = vmatpush1.bf16.msra.mxu0 %v340
  %383 = vmatprep.subr.bf16.mxu0 0
  %384 = vmatpush1.bf16.msra.mxu0 %v341
  %385 = vmatprep.subr.bf16.mxu0 0
  %386 = vmatpush1.bf16.msra.mxu0 %v342
  %387 = vmatprep.subr.bf16.mxu0 0
  %388 = vmatpush1.bf16.msra.mxu0 %v343
  %389 = vmatprep.subr.bf16.mxu0 0
  %390 = vmatpush1.bf16.msra.mxu0 %v344
  %391 = vmatprep.subr.bf16.mxu0 0
  %392 = vmatpush1.bf16.msra.mxu0 %v345
  %393 = vmatprep.subr.bf16.mxu0 0
  %394 = vmatpush1.bf16.msra.mxu0 %v346
  %395 = vmatprep.mubr.bf16.mxu0 %v232
  %396 = vmatmul.mubr.bf16.gmra.mrb[0].mxu0 %v231
  %v397 = vpop.f32.mrb[0].mxu0
  %v398 = vadd.f32 0.0, %v397
  %v399 = vpop.f32.mrb[0].mxu0
  %v400 = vpop.f32.mrb[0].mxu0
  %v401 = vadd.f32 0.0, %v400
  %v402 = vpop.f32.mrb[0].mxu0
  %403 = vmatprep.mubr.bf16.mxu0 %v234
  %404 = vmatmul.mubr.bf16.gmra.mrb[0].mxu0 %v233
  %v405 = vpop.f32.mrb[0].mxu0
  %v406 = vadd.f32 0.0, %v405
  %v407 = vpop.f32.mrb[0].mxu0
  %v408 = vpop.f32.mrb[0].mxu0
  %v409 = vadd.f32 0.0, %v408
  %v410 = vpop.f32.mrb[0].mxu0
  %411 = vdwg.mxu0
  %v412 = vld [vmem:[%s7] sm:$0x1]
  %v413 = vld [vmem:[%s8] sm:$0x1]
  %v414 = vadd.f32 %v398, %v401
  %v415 = vadd.f32 %v414, %v406
  %v416 = vadd.f32 %v415, %v409
  %v417 = vrot.slane %v416, 4
  %v418 = vadd.f32 %v416, %v417
  %v419 = vrot.slane %v418, 2
  %v420 = vadd.f32 %v418, %v419
  %v421 = vrot.slane %v420, 1
  %v422 = vadd.f32 %v420, %v421
  %423 = vrot.lane.b32.xlu0 %v422, 8
  %v424 = vpop.permute.xlu0 %423
  %v425 = vadd.f32 %v422, %v424
  %426 = vrot.lane.b32.xlu0 %v425, 16
  %v427 = vpop.permute.xlu0 %426
  %v428 = vadd.f32 %v425, %v427
  %429 = vrot.lane.b32.xlu0 %v428, 32
  %v430 = vpop.permute.xlu0 %429
  %v431 = vadd.f32 %v428, %v430
  %432 = vrot.lane.b32.xlu0 %v431, 64
  %v433 = vpop.permute.xlu0 %432
  %v434 = vadd.f32 %v431, %v433
  %v435 = vmul.f32 %v398, %v398
  %v436 = vmul.f32 %v401, %v401
  %v437 = vmul.f32 %v406, %v406
  %v438 = vmul.f32 %v409, %v409
  %v439 = vadd.f32 %v435, %v436
  %v440 = vadd.f32 %v439, %v437
  %v441 = vadd.f32 %v440, %v438
  %v442 = vrot.slane %v441, 4
  %v443 = vadd.f32 %v441, %v442
  %v444 = vrot.slane %v443, 2
  %v445 = vadd.f32 %v443, %v444
  %v446 = vrot.slane %v445, 1
  %v447 = vadd.f32 %v445, %v446
  %448 = vrot.lane.b32.xlu0 %v447, 8
  %v449 = vpop.permute.xlu0 %448
  %v450 = vadd.f32 %v447, %v449
  %451 = vrot.lane.b32.xlu0 %v450, 16
  %v452 = vpop.permute.xlu0 %451
  %v453 = vadd.f32 %v450, %v452
  %454 = vrot.lane.b32.xlu0 %v453, 32
  %v455 = vpop.permute.xlu0 %454
  %v456 = vadd.f32 %v453, %v455
  %457 = vrot.lane.b32.xlu0 %v456, 64
  %v458 = vpop.permute.xlu0 %457
  %v459 = vadd.f32 %v456, %v458
  %v460 = vmul.f32 %v434, 0.001953125
  %v461 = vmul.f32 %v459, 0.001953125
  %v462 = vmul.f32 %v460, %v460
  %v463 = vsub.f32 %v461, %v462
  %v464 = vmax.f32 %v463, 0.0
  %v465 = vlaneseq
  %v466 = vshrl.u32 %v465, 7
  %v467 = vsub.s32 0, %v466
  %v468 = vrot.slane %v460, %v467
  %v469 = vsub.f32 %v398, %v468
  %v470 = vsub.f32 %v401, %v468
  %v471 = vsub.f32 %v406, %v468
  %v472 = vsub.f32 %v409, %v468
  %v473 = vadd.f32 %v464, 1e-05
  %v474 = vrsqrt.pop %v473
  %v475 = vlaneseq
  %v476 = vshrl.u32 %v475, 7
  %v477 = vsub.s32 0, %v476
  %v478 = vrot.slane %v474, %v477
  %v479 = vmul.f32 %v469, %v478
  %v480 = vmul.f32 %v470, %v478
  %v481 = vmul.f32 %v471, %v478
  %v482 = vmul.f32 %v472, %v478
  %v484 = vlaneseq
  %v485 = vshrl.u32 %v484, 7
  %v486 = vsub.s32 0, %v485
  %v487 = vrot.slane %v412, %v486
  %v489 = vmul.f32 %v479, %v487
  %v490 = vmul.f32 %v480, %v487
  %v491 = vmul.f32 %v481, %v487
  %v492 = vmul.f32 %v482, %v487
  %v494 = vlaneseq
  %v495 = vshrl.u32 %v494, 7
  %v496 = vsub.s32 0, %v495
  %v497 = vrot.slane %v413, %v496
  %v499 = vadd.f32 %v489, %v497
  %v500 = vadd.f32 %v490, %v497
  %v501 = vadd.f32 %v491, %v497
  %v502 = vadd.f32 %v492, %v497
  %v503 = vmax.f32 %v499, 0.0
  %v504 = vmax.f32 %v500, 0.0
  %v505 = vmax.f32 %v501, 0.0
  %v506 = vmax.f32 %v502, 0.0
  %v507 = vlaneseq
  %v508 = vshrl.u32 %v507, 7
  %v509 = vadd.s32 %v508, 8
  %v510 = vadd.s32 %v508, 16
  %v511 = vadd.s32 %v508, 24
  %vm512 = vcmp.lt.s32.totalorder %v508, 0
  %v513 = vsub.s32 0, %v508
  %v514 = vsel %vm512, %v513, %v508
  %v515 = vshrl.u32 %v514, 4
  %v516 = vand.u32 %v514, 15
  %v517 = vsub.s32 0, %v516
  %v518 = vsel %vm512, %v517, %v516
  %vm519 = vcmp.lt.s32.totalorder %v509, 0
  %v520 = vsub.s32 0, %v509
  %v521 = vsel %vm519, %v520, %v509
  %v522 = vshrl.u32 %v521, 4
  %v523 = vand.u32 %v521, 15
  %v524 = vsub.s32 0, %v523
  %v525 = vsel %vm519, %v524, %v523
  %vm526 = vcmp.lt.s32.totalorder %v510, 0
  %v527 = vsub.s32 0, %v510
  %v528 = vsel %vm526, %v527, %v510
  %v529 = vshrl.u32 %v528, 4
  %v530 = vand.u32 %v528, 15
  %v531 = vsub.s32 0, %v530
  %v532 = vsel %vm526, %v531, %v530
  %vm533 = vcmp.lt.s32.totalorder %v511, 0
  %v534 = vsub.s32 0, %v511
  %v535 = vsel %vm533, %v534, %v511
  %v536 = vshrl.u32 %v535, 4
  %v537 = vand.u32 %v535, 15
  %v538 = vsub.s32 0, %v537
  %v539 = vsel %vm533, %v538, %v537
  %vm540 = vcmp.ne.s32.totalorder %v518, 0
  %vm541 = vcmp.ne.s32.totalorder %v525, 0
  %vm542 = vcmp.ne.s32.totalorder %v532, 0
  %vm543 = vcmp.ne.s32.totalorder %v539, 0
  %vm544 = vcmp.lt.s32.totalorder %v518, 0
  %vm545 = vcmp.lt.s32.totalorder %v525, 0
  %vm546 = vcmp.lt.s32.totalorder %v532, 0
  %vm547 = vcmp.lt.s32.totalorder %v539, 0
  %vm548 = vmand %vm544, %vm540
  %vm549 = vmand %vm545, %vm541
  %vm550 = vmand %vm546, %vm542
  %vm551 = vmand %vm547, %vm543
  %v552 = vadd.s32 %v518, 16
  %v553 = vadd.s32 %v525, 16
  %v554 = vadd.s32 %v532, 16
  %v555 = vadd.s32 %v539, 16
  %v556 = vsel %vm548, %v552, %v518
  %v557 = vsel %vm549, %v553, %v525
  %v558 = vsel %vm550, %v554, %v532
  %v559 = vsel %vm551, %v555, %v539
  %vm560 = vcmp.ne.s32.totalorder %v556, 0
  %vm561 = vcmp.ne.s32.totalorder %v557, 0
  %vm562 = vcmp.ne.s32.totalorder %v558, 0
  %vm563 = vcmp.ne.s32.totalorder %v559, 0
  %v564 = vrot.slane %v503, 7
  %v565 = vrot.slane %v504, 7
  %v566 = vrot.slane %v505, 7
  %v567 = vrot.slane %v506, 7
  %vm568 = vcmp.lt.s32.totalorder %v508, 1
  %v569 = vsel %vm568, %v566, %v567
  %v570 = vsel %vm568, %v565, %v566
  %v571 = vsel %vm568, %v564, %v565
  %v572 = vsel %vm568, %v567, %v564
  %v573 = vsel %vm560, 1, 0
  %v574 = vsel %vm561, 1, 0
  %v575 = vsel %vm562, 1, 0
  %v576 = vsel %vm563, 1, 0
  %vm577 = vcmp.eq.s32.totalorder %v573, 1
  %vm578 = vcmp.eq.s32.totalorder %v574, 1
  %vm579 = vcmp.eq.s32.totalorder %v575, 1
  %vm580 = vcmp.eq.s32.totalorder %v576, 1
  %v581 = vsel %vm577, %v572, 0.0
  %v582 = vsel %vm578, %v571, 0.0
  %v583 = vsel %vm579, %v570, 0.0
  %v584 = vsel %vm580, %v569, 0.0
  %vm585 = vcmp.ne.s32.totalorder %v556, 15
  %vm586 = vcmp.ne.s32.totalorder %v557, 15
  %vm587 = vcmp.ne.s32.totalorder %v558, 15
  %vm588 = vcmp.ne.s32.totalorder %v559, 15
  %v589 = vrot.slane %v503, 1
  %v590 = vrot.slane %v504, 1
  %v591 = vrot.slane %v505, 1
  %v592 = vrot.slane %v506, 1
  %vm593 = vcmp.lt.s32.totalorder %v508, 7
  %v594 = vsel %vm593, %v591, %v592
  %v595 = vsel %vm593, %v590, %v591
  %v596 = vsel %vm593, %v589, %v590
  %v597 = vsel %vm593, %v592, %v589
  %v598 = vsel %vm585, 1, 0
  %v599 = vsel %vm586, 1, 0
  %v600 = vsel %vm587, 1, 0
  %v601 = vsel %vm588, 1, 0
  %vm602 = vcmp.eq.s32.totalorder %v598, 1
  %vm603 = vcmp.eq.s32.totalorder %v599, 1
  %vm604 = vcmp.eq.s32.totalorder %v600, 1
  %vm605 = vcmp.eq.s32.totalorder %v601, 1
  %v606 = vsel %vm602, %v596, 0.0
  %v607 = vsel %vm603, %v595, 0.0
  %v608 = vsel %vm604, %v594, 0.0
  %v609 = vsel %vm605, %v597, 0.0
  %v610 = vpack.c.bf16 %v582, %v581
  %v611 = vpack.c.bf16 %v504, %v503
  %v612 = vpack.c.bf16 %v607, %v606
  %v613 = vpack.c.bf16 %v584, %v583
  %v614 = vpack.c.bf16 %v506, %v505
  %v615 = vpack.c.bf16 %v609, %v608
  %v616 = vld [vmem:[%s2] sm:$0xf]
  %v617 = vld [vmem:[%s2 + $0x4] sm:$0xf]
  %v618 = vld [vmem:[%s2 + $0x8] sm:$0xf]
  %v619 = vld [vmem:[%s2 + $0xc] sm:$0xf]
  %v620 = vld [vmem:[%s2 + $0x10] sm:$0xf]
  %v621 = vld [vmem:[%s2 + $0x14] sm:$0xf]
  %v622 = vld [vmem:[%s2 + $0x18] sm:$0xf]
  %v623 = vld [vmem:[%s2 + $0x1c] sm:$0xf]
  %v624 = vld [vmem:[%s2 + $0x20] sm:$0xf]
  %v625 = vld [vmem:[%s2 + $0x24] sm:$0xf]
  %v626 = vld [vmem:[%s2 + $0x28] sm:$0xf]
  %v627 = vld [vmem:[%s2 + $0x2c] sm:$0xf]
  %v628 = vld [vmem:[%s2 + $0x30] sm:$0xf]
  %v629 = vld [vmem:[%s2 + $0x34] sm:$0xf]
  %v630 = vld [vmem:[%s2 + $0x38] sm:$0xf]
  %v631 = vld [vmem:[%s2 + $0x3c] sm:$0xf]
  %v632 = vld [vmem:[%s2 + $0x40] sm:$0xf]
  %v633 = vld [vmem:[%s2 + $0x44] sm:$0xf]
  %v634 = vld [vmem:[%s2 + $0x48] sm:$0xf]
  %v635 = vld [vmem:[%s2 + $0x4c] sm:$0xf]
  %v636 = vld [vmem:[%s2 + $0x50] sm:$0xf]
  %v637 = vld [vmem:[%s2 + $0x54] sm:$0xf]
  %v638 = vld [vmem:[%s2 + $0x58] sm:$0xf]
  %v639 = vld [vmem:[%s2 + $0x5c] sm:$0xf]
  %v640 = vld [vmem:[%s2 + $0x60] sm:$0xf]
  %v641 = vld [vmem:[%s2 + $0x64] sm:$0xf]
  %v642 = vld [vmem:[%s2 + $0x68] sm:$0xf]
  %v643 = vld [vmem:[%s2 + $0x6c] sm:$0xf]
  %v644 = vld [vmem:[%s2 + $0x70] sm:$0xf]
  %v645 = vld [vmem:[%s2 + $0x74] sm:$0xf]
  %v646 = vld [vmem:[%s2 + $0x78] sm:$0xf]
  %v647 = vld [vmem:[%s2 + $0x7c] sm:$0xf]
  %v648 = vld [vmem:[%s2 + $0x80] sm:$0xf]
  %v649 = vld [vmem:[%s2 + $0x84] sm:$0xf]
  %v650 = vld [vmem:[%s2 + $0x88] sm:$0xf]
  %v651 = vld [vmem:[%s2 + $0x8c] sm:$0xf]
  %v652 = vld [vmem:[%s2 + $0x90] sm:$0xf]
  %v653 = vld [vmem:[%s2 + $0x94] sm:$0xf]
  %v654 = vld [vmem:[%s2 + $0x98] sm:$0xf]
  %v655 = vld [vmem:[%s2 + $0x9c] sm:$0xf]
  %v656 = vld [vmem:[%s2 + $0xa0] sm:$0xf]
  %v657 = vld [vmem:[%s2 + $0xa4] sm:$0xf]
  %v658 = vld [vmem:[%s2 + $0xa8] sm:$0xf]
  %v659 = vld [vmem:[%s2 + $0xac] sm:$0xf]
  %v660 = vld [vmem:[%s2 + $0xb0] sm:$0xf]
  %v661 = vld [vmem:[%s2 + $0xb4] sm:$0xf]
  %v662 = vld [vmem:[%s2 + $0xb8] sm:$0xf]
  %v663 = vld [vmem:[%s2 + $0xbc] sm:$0xf]
  %v712 = vunpack.c.l.b16 %v616
  %v713 = vunpack.c.l.b16 %v617
  %v714 = vunpack.c.l.b16 %v618
  %v715 = vunpack.c.l.b16 %v619
  %v716 = vunpack.c.l.b16 %v620
  %v717 = vunpack.c.l.b16 %v621
  %v718 = vunpack.c.l.b16 %v622
  %v719 = vunpack.c.l.b16 %v623
  %v720 = vunpack.c.l.b16 %v624
  %v721 = vunpack.c.l.b16 %v625
  %v722 = vunpack.c.l.b16 %v626
  %v723 = vunpack.c.l.b16 %v627
  %v724 = vunpack.c.l.b16 %v628
  %v725 = vunpack.c.l.b16 %v629
  %v726 = vunpack.c.l.b16 %v630
  %v727 = vunpack.c.l.b16 %v631
  %v728 = vunpack.c.l.b16 %v632
  %v729 = vunpack.c.l.b16 %v633
  %v730 = vunpack.c.l.b16 %v634
  %v731 = vunpack.c.l.b16 %v635
  %v732 = vunpack.c.l.b16 %v636
  %v733 = vunpack.c.l.b16 %v637
  %v734 = vunpack.c.l.b16 %v638
  %v735 = vunpack.c.l.b16 %v639
  %v736 = vunpack.c.l.b16 %v640
  %v737 = vunpack.c.l.b16 %v641
  %v738 = vunpack.c.l.b16 %v642
  %v739 = vunpack.c.l.b16 %v643
  %v740 = vunpack.c.l.b16 %v644
  %v741 = vunpack.c.l.b16 %v645
  %v742 = vunpack.c.l.b16 %v646
  %v743 = vunpack.c.l.b16 %v647
  %v744 = vunpack.c.l.b16 %v648
  %v745 = vunpack.c.l.b16 %v649
  %v746 = vunpack.c.l.b16 %v650
  %v747 = vunpack.c.l.b16 %v651
  %v748 = vunpack.c.l.b16 %v652
  %v749 = vunpack.c.l.b16 %v653
  %v750 = vunpack.c.l.b16 %v654
  %v751 = vunpack.c.l.b16 %v655
  %v752 = vunpack.c.l.b16 %v656
  %v753 = vunpack.c.l.b16 %v657
  %v754 = vunpack.c.l.b16 %v658
  %v755 = vunpack.c.l.b16 %v659
  %v756 = vunpack.c.l.b16 %v660
  %v757 = vunpack.c.l.b16 %v661
  %v758 = vunpack.c.l.b16 %v662
  %v759 = vunpack.c.l.b16 %v663
  %v760 = vpack.c.b16 %v713, %v712
  %v761 = vpack.c.b16 %v715, %v714
  %v762 = vpack.c.b16 %v717, %v716
  %v763 = vpack.c.b16 %v719, %v718
  %v764 = vpack.c.b16 %v721, %v720
  %v765 = vpack.c.b16 %v723, %v722
  %v766 = vpack.c.b16 %v725, %v724
  %v767 = vpack.c.b16 %v727, %v726
  %v768 = vpack.c.b16 %v729, %v728
  %v769 = vpack.c.b16 %v731, %v730
  %v770 = vpack.c.b16 %v733, %v732
  %v771 = vpack.c.b16 %v735, %v734
  %v772 = vpack.c.b16 %v737, %v736
  %v773 = vpack.c.b16 %v739, %v738
  %v774 = vpack.c.b16 %v741, %v740
  %v775 = vpack.c.b16 %v743, %v742
  %v776 = vpack.c.b16 %v745, %v744
  %v777 = vpack.c.b16 %v747, %v746
  %v778 = vpack.c.b16 %v749, %v748
  %v779 = vpack.c.b16 %v751, %v750
  %v780 = vpack.c.b16 %v753, %v752
  %v781 = vpack.c.b16 %v755, %v754
  %v782 = vpack.c.b16 %v757, %v756
  %v783 = vpack.c.b16 %v759, %v758
  %808 = vmatprep.subr.bf16.mxu0 0
  %809 = vmatpush1.bf16.msra.mxu0 %v760
  %810 = vmatprep.subr.bf16.mxu0 0
  %811 = vmatpush1.bf16.msra.mxu0 %v761
  %812 = vmatprep.subr.bf16.mxu0 0
  %813 = vmatpush1.bf16.msra.mxu0 %v762
  %814 = vmatprep.subr.bf16.mxu0 0
  %815 = vmatpush1.bf16.msra.mxu0 %v763
  %816 = vmatprep.subr.bf16.mxu0 0
  %817 = vmatpush1.bf16.msra.mxu0 %v764
  %818 = vmatprep.subr.bf16.mxu0 0
  %819 = vmatpush1.bf16.msra.mxu0 %v765
  %820 = vmatprep.subr.bf16.mxu0 0
  %821 = vmatpush1.bf16.msra.mxu0 %v766
  %822 = vmatprep.subr.bf16.mxu0 0
  %823 = vmatpush1.bf16.msra.mxu0 %v767
  %824 = vmatprep.subr.bf16.mxu0 0
  %825 = vmatpush1.bf16.msra.mxu0 %v768
  %826 = vmatprep.subr.bf16.mxu0 0
  %827 = vmatpush1.bf16.msra.mxu0 %v769
  %828 = vmatprep.subr.bf16.mxu0 0
  %829 = vmatpush1.bf16.msra.mxu0 %v770
  %830 = vmatprep.subr.bf16.mxu0 0
  %831 = vmatpush1.bf16.msra.mxu0 %v771
  %832 = vmatprep.subr.bf16.mxu0 0
  %833 = vmatpush1.bf16.msra.mxu0 %v772
  %834 = vmatprep.subr.bf16.mxu0 0
  %835 = vmatpush1.bf16.msra.mxu0 %v773
  %836 = vmatprep.subr.bf16.mxu0 0
  %837 = vmatpush1.bf16.msra.mxu0 %v774
  %838 = vmatprep.subr.bf16.mxu0 0
  %839 = vmatpush1.bf16.msra.mxu0 %v775
  %840 = vmatprep.mubr.bf16.mxu0 %v611
  %841 = vmatmul.mubr.bf16.gmra.mrb[0].mxu0 %v610
  %v842 = vpop.f32.mrb[0].mxu0
  %v843 = vadd.f32 0.0, %v842
  %v844 = vpop.f32.mrb[0].mxu0
  %v845 = vpop.f32.mrb[0].mxu0
  %v846 = vadd.f32 0.0, %v845
  %v847 = vpop.f32.mrb[0].mxu0
  %848 = vmatprep.mubr.bf16.mxu0 %v614
  %849 = vmatmul.mubr.bf16.gmra.mrb[0].mxu0 %v613
  %v850 = vpop.f32.mrb[0].mxu0
  %v851 = vadd.f32 0.0, %v850
  %v852 = vpop.f32.mrb[0].mxu0
  %v853 = vpop.f32.mrb[0].mxu0
  %v854 = vadd.f32 0.0, %v853
  %v855 = vpop.f32.mrb[0].mxu0
  %856 = vdwg.mxu0
  %857 = vmatprep.subr.bf16.mxu0 0
  %858 = vmatpush1.bf16.msra.mxu0 %v776
  %859 = vmatprep.subr.bf16.mxu0 0
  %860 = vmatpush1.bf16.msra.mxu0 %v777
  %861 = vmatprep.subr.bf16.mxu0 0
  %862 = vmatpush1.bf16.msra.mxu0 %v778
  %863 = vmatprep.subr.bf16.mxu0 0
  %864 = vmatpush1.bf16.msra.mxu0 %v779
  %865 = vmatprep.subr.bf16.mxu0 0
  %866 = vmatpush1.bf16.msra.mxu0 %v780
  %867 = vmatprep.subr.bf16.mxu0 0
  %868 = vmatpush1.bf16.msra.mxu0 %v781
  %869 = vmatprep.subr.bf16.mxu0 0
  %870 = vmatpush1.bf16.msra.mxu0 %v782
  %871 = vmatprep.subr.bf16.mxu0 0
  %872 = vmatpush1.bf16.msra.mxu0 %v783
  %873 = vmatprep.subr.bf16.mxu0 0
  %874 = vmatpush1.bf16.msra.mxu0 0
  %875 = vmatprep.subr.bf16.mxu0 0
  %876 = vmatpush1.bf16.msra.mxu0 0
  %877 = vmatprep.subr.bf16.mxu0 0
  %878 = vmatpush1.bf16.msra.mxu0 0
  %879 = vmatprep.subr.bf16.mxu0 0
  %880 = vmatpush1.bf16.msra.mxu0 0
  %881 = vmatprep.subr.bf16.mxu0 0
  %882 = vmatpush1.bf16.msra.mxu0 0
  %883 = vmatprep.subr.bf16.mxu0 0
  %884 = vmatpush1.bf16.msra.mxu0 0
  %885 = vmatprep.subr.bf16.mxu0 0
  %886 = vmatpush1.bf16.msra.mxu0 0
  %887 = vmatprep.subr.bf16.mxu0 0
  %888 = vmatpush1.bf16.msra.mxu0 0
  %889 = vmatprep.mubr.bf16.mxu0 0
  %890 = vmatmul.mubr.bf16.gmra.mrb[0].mxu0 %v612
  %v891 = vpop.f32.mrb[0].mxu0
  %v892 = vadd.f32 %v843, %v891
  %v893 = vpop.f32.mrb[0].mxu0
  %v894 = vpop.f32.mrb[0].mxu0
  %v895 = vadd.f32 %v846, %v894
  %v896 = vpop.f32.mrb[0].mxu0
  %897 = vmatprep.mubr.bf16.mxu0 0
  %898 = vmatmul.mubr.bf16.gmra.mrb[0].mxu0 %v615
  %v899 = vpop.f32.mrb[0].mxu0
  %v900 = vadd.f32 %v851, %v899
  %v901 = vpop.f32.mrb[0].mxu0
  %v902 = vpop.f32.mrb[0].mxu0
  %v903 = vadd.f32 %v854, %v902
  %v904 = vpop.f32.mrb[0].mxu0
  %905 = vdwg.mxu0
  %v906 = vld [vmem:[%s9] sm:$0x1]
  %v907 = vld [vmem:[%s10] sm:$0x1]
  %v908 = vadd.f32 %v892, %v895
  %v909 = vadd.f32 %v908, %v900
  %v910 = vadd.f32 %v909, %v903
  %v911 = vrot.slane %v910, 4
  %v912 = vadd.f32 %v910, %v911
  %v913 = vrot.slane %v912, 2
  %v914 = vadd.f32 %v912, %v913
  %v915 = vrot.slane %v914, 1
  %v916 = vadd.f32 %v914, %v915
  %917 = vrot.lane.b32.xlu0 %v916, 8
  %v918 = vpop.permute.xlu0 %917
  %v919 = vadd.f32 %v916, %v918
  %920 = vrot.lane.b32.xlu0 %v919, 16
  %v921 = vpop.permute.xlu0 %920
  %v922 = vadd.f32 %v919, %v921
  %923 = vrot.lane.b32.xlu0 %v922, 32
  %v924 = vpop.permute.xlu0 %923
  %v925 = vadd.f32 %v922, %v924
  %926 = vrot.lane.b32.xlu0 %v925, 64
  %v927 = vpop.permute.xlu0 %926
  %v928 = vadd.f32 %v925, %v927
  %v929 = vmul.f32 %v892, %v892
  %v930 = vmul.f32 %v895, %v895
  %v931 = vmul.f32 %v900, %v900
  %v932 = vmul.f32 %v903, %v903
  %v933 = vadd.f32 %v929, %v930
  %v934 = vadd.f32 %v933, %v931
  %v935 = vadd.f32 %v934, %v932
  %v936 = vrot.slane %v935, 4
  %v937 = vadd.f32 %v935, %v936
  %v938 = vrot.slane %v937, 2
  %v939 = vadd.f32 %v937, %v938
  %v940 = vrot.slane %v939, 1
  %v941 = vadd.f32 %v939, %v940
  %942 = vrot.lane.b32.xlu0 %v941, 8
  %v943 = vpop.permute.xlu0 %942
  %v944 = vadd.f32 %v941, %v943
  %945 = vrot.lane.b32.xlu0 %v944, 16
  %v946 = vpop.permute.xlu0 %945
  %v947 = vadd.f32 %v944, %v946
  %948 = vrot.lane.b32.xlu0 %v947, 32
  %v949 = vpop.permute.xlu0 %948
  %v950 = vadd.f32 %v947, %v949
  %951 = vrot.lane.b32.xlu0 %v950, 64
  %v952 = vpop.permute.xlu0 %951
  %v953 = vadd.f32 %v950, %v952
  %v954 = vmul.f32 %v928, 0.001953125
  %v955 = vmul.f32 %v953, 0.001953125
  %v956 = vmul.f32 %v954, %v954
  %v957 = vsub.f32 %v955, %v956
  %v958 = vmax.f32 %v957, 0.0
  %v959 = vlaneseq
  %v960 = vshrl.u32 %v959, 7
  %v961 = vsub.s32 0, %v960
  %v962 = vrot.slane %v954, %v961
  %v963 = vsub.f32 %v892, %v962
  %v964 = vsub.f32 %v895, %v962
  %v965 = vsub.f32 %v900, %v962
  %v966 = vsub.f32 %v903, %v962
  %v967 = vadd.f32 %v958, 1e-05
  %v968 = vrsqrt.pop %v967
  %v969 = vlaneseq
  %v970 = vshrl.u32 %v969, 7
  %v971 = vsub.s32 0, %v970
  %v972 = vrot.slane %v968, %v971
  %v973 = vmul.f32 %v963, %v972
  %v974 = vmul.f32 %v964, %v972
  %v975 = vmul.f32 %v965, %v972
  %v976 = vmul.f32 %v966, %v972
  %v978 = vlaneseq
  %v979 = vshrl.u32 %v978, 7
  %v980 = vsub.s32 0, %v979
  %v981 = vrot.slane %v906, %v980
  %v983 = vmul.f32 %v973, %v981
  %v984 = vmul.f32 %v974, %v981
  %v985 = vmul.f32 %v975, %v981
  %v986 = vmul.f32 %v976, %v981
  %v988 = vlaneseq
  %v989 = vshrl.u32 %v988, 7
  %v990 = vsub.s32 0, %v989
  %v991 = vrot.slane %v907, %v990
  %v993 = vadd.f32 %v983, %v991
  %v994 = vadd.f32 %v984, %v991
  %v995 = vadd.f32 %v985, %v991
  %v996 = vadd.f32 %v986, %v991
  %v997 = vmax.f32 %v993, 0.0
  %v998 = vmax.f32 %v994, 0.0
  %v999 = vmax.f32 %v995, 0.0
  %v1000 = vmax.f32 %v996, 0.0
  %v1001 = vpack.c.bf16 %v998, %v997
  %v1002 = vpack.c.bf16 %v1000, %v999
  %v1003 = vld [vmem:[%s3] sm:$0xff]
  %v1004 = vld [vmem:[%s3 + $0x8] sm:$0xff]
  %v1005 = vld [vmem:[%s3 + $0x10] sm:$0xff]
  %v1006 = vld [vmem:[%s3 + $0x18] sm:$0xff]
  %v1007 = vld [vmem:[%s3 + $0x20] sm:$0xff]
  %v1008 = vld [vmem:[%s3 + $0x28] sm:$0xff]
  %v1009 = vld [vmem:[%s3 + $0x30] sm:$0xff]
  %v1010 = vld [vmem:[%s3 + $0x38] sm:$0xff]
  %v1011 = vld [vmem:[%s3 + $0x40] sm:$0xff]
  %v1012 = vld [vmem:[%s3 + $0x48] sm:$0xff]
  %v1013 = vld [vmem:[%s3 + $0x50] sm:$0xff]
  %v1014 = vld [vmem:[%s3 + $0x58] sm:$0xff]
  %v1015 = vld [vmem:[%s3 + $0x60] sm:$0xff]
  %v1016 = vld [vmem:[%s3 + $0x68] sm:$0xff]
  %v1017 = vld [vmem:[%s3 + $0x70] sm:$0xff]
  %v1018 = vld [vmem:[%s3 + $0x78] sm:$0xff]
  %v1019 = vld [vmem:[%s3 + $0x80] sm:$0xff]
  %v1020 = vld [vmem:[%s3 + $0x88] sm:$0xff]
  %v1021 = vld [vmem:[%s3 + $0x90] sm:$0xff]
  %v1022 = vld [vmem:[%s3 + $0x98] sm:$0xff]
  %v1023 = vld [vmem:[%s3 + $0xa0] sm:$0xff]
  %v1024 = vld [vmem:[%s3 + $0xa8] sm:$0xff]
  %v1025 = vld [vmem:[%s3 + $0xb0] sm:$0xff]
  %v1026 = vld [vmem:[%s3 + $0xb8] sm:$0xff]
  %v1027 = vld [vmem:[%s3 + $0xc0] sm:$0xff]
  %v1028 = vld [vmem:[%s3 + $0xc8] sm:$0xff]
  %v1029 = vld [vmem:[%s3 + $0xd0] sm:$0xff]
  %v1030 = vld [vmem:[%s3 + $0xd8] sm:$0xff]
  %v1031 = vld [vmem:[%s3 + $0xe0] sm:$0xff]
  %v1032 = vld [vmem:[%s3 + $0xe8] sm:$0xff]
  %v1033 = vld [vmem:[%s3 + $0xf0] sm:$0xff]
  %v1034 = vld [vmem:[%s3 + $0xf8] sm:$0xff]
  %v1035 = vpack.c.bf16 %v47, %v45
  %v1036 = vpack.c.bf16 %v48, %v46
  %v1037 = vpack.c.bf16 %v51, %v49
  %v1038 = vpack.c.bf16 %v52, %v50
  %v1039 = vld [vmem:[%s4] sm:$0xff]
  %v1040 = vld [vmem:[%s4 + $0x8] sm:$0xff]
  %v1041 = vld [vmem:[%s4 + $0x10] sm:$0xff]
  %v1042 = vld [vmem:[%s4 + $0x18] sm:$0xff]
  %v1043 = vld [vmem:[%s4 + $0x20] sm:$0xff]
  %v1044 = vld [vmem:[%s4 + $0x28] sm:$0xff]
  %v1045 = vld [vmem:[%s4 + $0x30] sm:$0xff]
  %v1046 = vld [vmem:[%s4 + $0x38] sm:$0xff]
  %v1047 = vld [vmem:[%s4 + $0x40] sm:$0xff]
  %v1048 = vld [vmem:[%s4 + $0x48] sm:$0xff]
  %v1049 = vld [vmem:[%s4 + $0x50] sm:$0xff]
  %v1050 = vld [vmem:[%s4 + $0x58] sm:$0xff]
  %v1051 = vld [vmem:[%s4 + $0x60] sm:$0xff]
  %v1052 = vld [vmem:[%s4 + $0x68] sm:$0xff]
  %v1053 = vld [vmem:[%s4 + $0x70] sm:$0xff]
  %v1054 = vld [vmem:[%s4 + $0x78] sm:$0xff]
  %v1055 = vld [vmem:[%s4 + $0x80] sm:$0xff]
  %v1056 = vld [vmem:[%s4 + $0x88] sm:$0xff]
  %v1057 = vld [vmem:[%s4 + $0x90] sm:$0xff]
  %v1058 = vld [vmem:[%s4 + $0x98] sm:$0xff]
  %v1059 = vld [vmem:[%s4 + $0xa0] sm:$0xff]
  %v1060 = vld [vmem:[%s4 + $0xa8] sm:$0xff]
  %v1061 = vld [vmem:[%s4 + $0xb0] sm:$0xff]
  %v1062 = vld [vmem:[%s4 + $0xb8] sm:$0xff]
  %v1063 = vld [vmem:[%s4 + $0xc0] sm:$0xff]
  %v1064 = vld [vmem:[%s4 + $0xc8] sm:$0xff]
  %v1065 = vld [vmem:[%s4 + $0xd0] sm:$0xff]
  %v1066 = vld [vmem:[%s4 + $0xd8] sm:$0xff]
  %v1067 = vld [vmem:[%s4 + $0xe0] sm:$0xff]
  %v1068 = vld [vmem:[%s4 + $0xe8] sm:$0xff]
  %v1069 = vld [vmem:[%s4 + $0xf0] sm:$0xff]
  %v1070 = vld [vmem:[%s4 + $0xf8] sm:$0xff]
  %v1071 = vld [vmem:[%s4 + $0x100] sm:$0xff]
  %v1072 = vld [vmem:[%s4 + $0x108] sm:$0xff]
  %v1073 = vld [vmem:[%s4 + $0x110] sm:$0xff]
  %v1074 = vld [vmem:[%s4 + $0x118] sm:$0xff]
  %v1075 = vld [vmem:[%s4 + $0x120] sm:$0xff]
  %v1076 = vld [vmem:[%s4 + $0x128] sm:$0xff]
  %v1077 = vld [vmem:[%s4 + $0x130] sm:$0xff]
  %v1078 = vld [vmem:[%s4 + $0x138] sm:$0xff]
  %v1079 = vld [vmem:[%s4 + $0x140] sm:$0xff]
  %v1080 = vld [vmem:[%s4 + $0x148] sm:$0xff]
  %v1081 = vld [vmem:[%s4 + $0x150] sm:$0xff]
  %v1082 = vld [vmem:[%s4 + $0x158] sm:$0xff]
  %v1083 = vld [vmem:[%s4 + $0x160] sm:$0xff]
  %v1084 = vld [vmem:[%s4 + $0x168] sm:$0xff]
  %v1085 = vld [vmem:[%s4 + $0x170] sm:$0xff]
  %v1086 = vld [vmem:[%s4 + $0x178] sm:$0xff]
  %v1087 = vld [vmem:[%s4 + $0x180] sm:$0xff]
  %v1088 = vld [vmem:[%s4 + $0x188] sm:$0xff]
  %v1089 = vld [vmem:[%s4 + $0x190] sm:$0xff]
  %v1090 = vld [vmem:[%s4 + $0x198] sm:$0xff]
  %v1091 = vld [vmem:[%s4 + $0x1a0] sm:$0xff]
  %v1092 = vld [vmem:[%s4 + $0x1a8] sm:$0xff]
  %v1093 = vld [vmem:[%s4 + $0x1b0] sm:$0xff]
  %v1094 = vld [vmem:[%s4 + $0x1b8] sm:$0xff]
  %v1095 = vld [vmem:[%s4 + $0x1c0] sm:$0xff]
  %v1096 = vld [vmem:[%s4 + $0x1c8] sm:$0xff]
  %v1097 = vld [vmem:[%s4 + $0x1d0] sm:$0xff]
  %v1098 = vld [vmem:[%s4 + $0x1d8] sm:$0xff]
  %v1099 = vld [vmem:[%s4 + $0x1e0] sm:$0xff]
  %v1100 = vld [vmem:[%s4 + $0x1e8] sm:$0xff]
  %v1101 = vld [vmem:[%s4 + $0x1f0] sm:$0xff]
  %v1102 = vld [vmem:[%s4 + $0x1f8] sm:$0xff]
  %v1167 = vunpack.c.l.b16 %v1039
  %v1168 = vunpack.c.h.b16 %v1039
  %v1169 = vunpack.c.l.b16 %v1040
  %v1170 = vunpack.c.h.b16 %v1040
  %v1171 = vunpack.c.l.b16 %v1041
  %v1172 = vunpack.c.h.b16 %v1041
  %v1173 = vunpack.c.l.b16 %v1042
  %v1174 = vunpack.c.h.b16 %v1042
  %v1175 = vunpack.c.l.b16 %v1043
  %v1176 = vunpack.c.h.b16 %v1043
  %v1177 = vunpack.c.l.b16 %v1044
  %v1178 = vunpack.c.h.b16 %v1044
  %v1179 = vunpack.c.l.b16 %v1045
  %v1180 = vunpack.c.h.b16 %v1045
  %v1181 = vunpack.c.l.b16 %v1046
  %v1182 = vunpack.c.h.b16 %v1046
  %v1183 = vunpack.c.l.b16 %v1047
  %v1184 = vunpack.c.h.b16 %v1047
  %v1185 = vunpack.c.l.b16 %v1048
  %v1186 = vunpack.c.h.b16 %v1048
  %v1187 = vunpack.c.l.b16 %v1049
  %v1188 = vunpack.c.h.b16 %v1049
  %v1189 = vunpack.c.l.b16 %v1050
  %v1190 = vunpack.c.h.b16 %v1050
  %v1191 = vunpack.c.l.b16 %v1051
  %v1192 = vunpack.c.h.b16 %v1051
  %v1193 = vunpack.c.l.b16 %v1052
  %v1194 = vunpack.c.h.b16 %v1052
  %v1195 = vunpack.c.l.b16 %v1053
  %v1196 = vunpack.c.h.b16 %v1053
  %v1197 = vunpack.c.l.b16 %v1054
  %v1198 = vunpack.c.h.b16 %v1054
  %v1199 = vunpack.c.l.b16 %v1055
  %v1200 = vunpack.c.h.b16 %v1055
  %v1201 = vunpack.c.l.b16 %v1056
  %v1202 = vunpack.c.h.b16 %v1056
  %v1203 = vunpack.c.l.b16 %v1057
  %v1204 = vunpack.c.h.b16 %v1057
  %v1205 = vunpack.c.l.b16 %v1058
  %v1206 = vunpack.c.h.b16 %v1058
  %v1207 = vunpack.c.l.b16 %v1059
  %v1208 = vunpack.c.h.b16 %v1059
  %v1209 = vunpack.c.l.b16 %v1060
  %v1210 = vunpack.c.h.b16 %v1060
  %v1211 = vunpack.c.l.b16 %v1061
  %v1212 = vunpack.c.h.b16 %v1061
  %v1213 = vunpack.c.l.b16 %v1062
  %v1214 = vunpack.c.h.b16 %v1062
  %v1215 = vunpack.c.l.b16 %v1063
  %v1216 = vunpack.c.h.b16 %v1063
  %v1217 = vunpack.c.l.b16 %v1064
  %v1218 = vunpack.c.h.b16 %v1064
  %v1219 = vunpack.c.l.b16 %v1065
  %v1220 = vunpack.c.h.b16 %v1065
  %v1221 = vunpack.c.l.b16 %v1066
  %v1222 = vunpack.c.h.b16 %v1066
  %v1223 = vunpack.c.l.b16 %v1067
  %v1224 = vunpack.c.h.b16 %v1067
  %v1225 = vunpack.c.l.b16 %v1068
  %v1226 = vunpack.c.h.b16 %v1068
  %v1227 = vunpack.c.l.b16 %v1069
  %v1228 = vunpack.c.h.b16 %v1069
  %v1229 = vunpack.c.l.b16 %v1070
  %v1230 = vunpack.c.h.b16 %v1070
  %v1231 = vunpack.c.l.b16 %v1071
  %v1232 = vunpack.c.h.b16 %v1071
  %v1233 = vunpack.c.l.b16 %v1072
  %v1234 = vunpack.c.h.b16 %v1072
  %v1235 = vunpack.c.l.b16 %v1073
  %v1236 = vunpack.c.h.b16 %v1073
  %v1237 = vunpack.c.l.b16 %v1074
  %v1238 = vunpack.c.h.b16 %v1074
  %v1239 = vunpack.c.l.b16 %v1075
  %v1240 = vunpack.c.h.b16 %v1075
  %v1241 = vunpack.c.l.b16 %v1076
  %v1242 = vunpack.c.h.b16 %v1076
  %v1243 = vunpack.c.l.b16 %v1077
  %v1244 = vunpack.c.h.b16 %v1077
  %v1245 = vunpack.c.l.b16 %v1078
  %v1246 = vunpack.c.h.b16 %v1078
  %v1247 = vunpack.c.l.b16 %v1079
  %v1248 = vunpack.c.h.b16 %v1079
  %v1249 = vunpack.c.l.b16 %v1080
  %v1250 = vunpack.c.h.b16 %v1080
  %v1251 = vunpack.c.l.b16 %v1081
  %v1252 = vunpack.c.h.b16 %v1081
  %v1253 = vunpack.c.l.b16 %v1082
  %v1254 = vunpack.c.h.b16 %v1082
  %v1255 = vunpack.c.l.b16 %v1083
  %v1256 = vunpack.c.h.b16 %v1083
  %v1257 = vunpack.c.l.b16 %v1084
  %v1258 = vunpack.c.h.b16 %v1084
  %v1259 = vunpack.c.l.b16 %v1085
  %v1260 = vunpack.c.h.b16 %v1085
  %v1261 = vunpack.c.l.b16 %v1086
  %v1262 = vunpack.c.h.b16 %v1086
  %v1263 = vunpack.c.l.b16 %v1087
  %v1264 = vunpack.c.h.b16 %v1087
  %v1265 = vunpack.c.l.b16 %v1088
  %v1266 = vunpack.c.h.b16 %v1088
  %v1267 = vunpack.c.l.b16 %v1089
  %v1268 = vunpack.c.h.b16 %v1089
  %v1269 = vunpack.c.l.b16 %v1090
  %v1270 = vunpack.c.h.b16 %v1090
  %v1271 = vunpack.c.l.b16 %v1091
  %v1272 = vunpack.c.h.b16 %v1091
  %v1273 = vunpack.c.l.b16 %v1092
  %v1274 = vunpack.c.h.b16 %v1092
  %v1275 = vunpack.c.l.b16 %v1093
  %v1276 = vunpack.c.h.b16 %v1093
  %v1277 = vunpack.c.l.b16 %v1094
  %v1278 = vunpack.c.h.b16 %v1094
  %v1279 = vunpack.c.l.b16 %v1095
  %v1280 = vunpack.c.h.b16 %v1095
  %v1281 = vunpack.c.l.b16 %v1096
  %v1282 = vunpack.c.h.b16 %v1096
  %v1283 = vunpack.c.l.b16 %v1097
  %v1284 = vunpack.c.h.b16 %v1097
  %v1285 = vunpack.c.l.b16 %v1098
  %v1286 = vunpack.c.h.b16 %v1098
  %v1287 = vunpack.c.l.b16 %v1099
  %v1288 = vunpack.c.h.b16 %v1099
  %v1289 = vunpack.c.l.b16 %v1100
  %v1290 = vunpack.c.h.b16 %v1100
  %v1291 = vunpack.c.l.b16 %v1101
  %v1292 = vunpack.c.h.b16 %v1101
  %v1293 = vunpack.c.l.b16 %v1102
  %v1294 = vunpack.c.h.b16 %v1102
  %v1295 = vpack.c.b16 %v1171, %v1167
  %v1296 = vpack.c.b16 %v1172, %v1168
  %v1297 = vpack.c.b16 %v1173, %v1169
  %v1298 = vpack.c.b16 %v1174, %v1170
  %v1299 = vpack.c.b16 %v1179, %v1175
  %v1300 = vpack.c.b16 %v1180, %v1176
  %v1301 = vpack.c.b16 %v1181, %v1177
  %v1302 = vpack.c.b16 %v1182, %v1178
  %v1303 = vpack.c.b16 %v1187, %v1183
  %v1304 = vpack.c.b16 %v1188, %v1184
  %v1305 = vpack.c.b16 %v1189, %v1185
  %v1306 = vpack.c.b16 %v1190, %v1186
  %v1307 = vpack.c.b16 %v1195, %v1191
  %v1308 = vpack.c.b16 %v1196, %v1192
  %v1309 = vpack.c.b16 %v1197, %v1193
  %v1310 = vpack.c.b16 %v1198, %v1194
  %v1311 = vpack.c.b16 %v1203, %v1199
  %v1312 = vpack.c.b16 %v1204, %v1200
  %v1313 = vpack.c.b16 %v1205, %v1201
  %v1314 = vpack.c.b16 %v1206, %v1202
  %v1315 = vpack.c.b16 %v1211, %v1207
  %v1316 = vpack.c.b16 %v1212, %v1208
  %v1317 = vpack.c.b16 %v1213, %v1209
  %v1318 = vpack.c.b16 %v1214, %v1210
  %v1319 = vpack.c.b16 %v1219, %v1215
  %v1320 = vpack.c.b16 %v1220, %v1216
  %v1321 = vpack.c.b16 %v1221, %v1217
  %v1322 = vpack.c.b16 %v1222, %v1218
  %v1323 = vpack.c.b16 %v1227, %v1223
  %v1324 = vpack.c.b16 %v1228, %v1224
  %v1325 = vpack.c.b16 %v1229, %v1225
  %v1326 = vpack.c.b16 %v1230, %v1226
  %v1327 = vpack.c.b16 %v1235, %v1231
  %v1328 = vpack.c.b16 %v1236, %v1232
  %v1329 = vpack.c.b16 %v1237, %v1233
  %v1330 = vpack.c.b16 %v1238, %v1234
  %v1331 = vpack.c.b16 %v1243, %v1239
  %v1332 = vpack.c.b16 %v1244, %v1240
  %v1333 = vpack.c.b16 %v1245, %v1241
  %v1334 = vpack.c.b16 %v1246, %v1242
  %v1335 = vpack.c.b16 %v1251, %v1247
  %v1336 = vpack.c.b16 %v1252, %v1248
  %v1337 = vpack.c.b16 %v1253, %v1249
  %v1338 = vpack.c.b16 %v1254, %v1250
  %v1339 = vpack.c.b16 %v1259, %v1255
  %v1340 = vpack.c.b16 %v1260, %v1256
  %v1341 = vpack.c.b16 %v1261, %v1257
  %v1342 = vpack.c.b16 %v1262, %v1258
  %v1343 = vpack.c.b16 %v1267, %v1263
  %v1344 = vpack.c.b16 %v1268, %v1264
  %v1345 = vpack.c.b16 %v1269, %v1265
  %v1346 = vpack.c.b16 %v1270, %v1266
  %v1347 = vpack.c.b16 %v1275, %v1271
  %v1348 = vpack.c.b16 %v1276, %v1272
  %v1349 = vpack.c.b16 %v1277, %v1273
  %v1350 = vpack.c.b16 %v1278, %v1274
  %v1351 = vpack.c.b16 %v1283, %v1279
  %v1352 = vpack.c.b16 %v1284, %v1280
  %v1353 = vpack.c.b16 %v1285, %v1281
  %v1354 = vpack.c.b16 %v1286, %v1282
  %v1355 = vpack.c.b16 %v1291, %v1287
  %v1356 = vpack.c.b16 %v1292, %v1288
  %v1357 = vpack.c.b16 %v1293, %v1289
  %v1358 = vpack.c.b16 %v1294, %v1290
  %1423 = vmatprep.subr.bf16.mxu0 %v1296
  %1424 = vmatpush1.bf16.msra.mxu0 %v1295
  %1425 = vmatprep.subr.bf16.mxu0 %v1300
  %1426 = vmatpush1.bf16.msra.mxu0 %v1299
  %1427 = vmatprep.subr.bf16.mxu0 %v1304
  %1428 = vmatpush1.bf16.msra.mxu0 %v1303
  %1429 = vmatprep.subr.bf16.mxu0 %v1308
  %1430 = vmatpush1.bf16.msra.mxu0 %v1307
  %1431 = vmatprep.subr.bf16.mxu0 %v1312
  %1432 = vmatpush1.bf16.msra.mxu0 %v1311
  %1433 = vmatprep.subr.bf16.mxu0 %v1316
  %1434 = vmatpush1.bf16.msra.mxu0 %v1315
  %1435 = vmatprep.subr.bf16.mxu0 %v1320
  %1436 = vmatpush1.bf16.msra.mxu0 %v1319
  %1437 = vmatprep.subr.bf16.mxu0 %v1324
  %1438 = vmatpush1.bf16.msra.mxu0 %v1323
  %1439 = vmatprep.subr.bf16.mxu0 %v1328
  %1440 = vmatpush1.bf16.msra.mxu0 %v1327
  %1441 = vmatprep.subr.bf16.mxu0 %v1332
  %1442 = vmatpush1.bf16.msra.mxu0 %v1331
  %1443 = vmatprep.subr.bf16.mxu0 %v1336
  %1444 = vmatpush1.bf16.msra.mxu0 %v1335
  %1445 = vmatprep.subr.bf16.mxu0 %v1340
  %1446 = vmatpush1.bf16.msra.mxu0 %v1339
  %1447 = vmatprep.subr.bf16.mxu0 %v1344
  %1448 = vmatpush1.bf16.msra.mxu0 %v1343
  %1449 = vmatprep.subr.bf16.mxu0 %v1348
  %1450 = vmatpush1.bf16.msra.mxu0 %v1347
  %1451 = vmatprep.subr.bf16.mxu0 %v1352
  %1452 = vmatpush1.bf16.msra.mxu0 %v1351
  %1453 = vmatprep.subr.bf16.mxu0 %v1356
  %1454 = vmatpush1.bf16.msra.mxu0 %v1355
  %1455 = vmatprep.mubr.bf16.mxu0 %v1036
  %1456 = vmatmul.mubr.bf16.gmra.mrb[0].mxu0 %v1035
  %v1457 = vpop.f32.mrb[0].mxu0
  %v1458 = vadd.f32 0.0, %v1457
  %v1459 = vpop.f32.mrb[0].mxu0
  %v1460 = vadd.f32 0.0, %v1459
  %v1461 = vpop.f32.mrb[0].mxu0
  %v1462 = vadd.f32 0.0, %v1461
  %v1463 = vpop.f32.mrb[0].mxu0
  %v1464 = vadd.f32 0.0, %v1463
  %1465 = vmatprep.mubr.bf16.mxu0 %v1038
  %1466 = vmatmul.mubr.bf16.gmra.mrb[0].mxu0 %v1037
  %v1467 = vpop.f32.mrb[0].mxu0
  %v1468 = vadd.f32 0.0, %v1467
  %v1469 = vpop.f32.mrb[0].mxu0
  %v1470 = vadd.f32 0.0, %v1469
  %v1471 = vpop.f32.mrb[0].mxu0
  %v1472 = vadd.f32 0.0, %v1471
  %v1473 = vpop.f32.mrb[0].mxu0
  %v1474 = vadd.f32 0.0, %v1473
  %1475 = vdwg.mxu0
  %1476 = vmatprep.subr.bf16.mxu0 %v1298
  %1477 = vmatpush1.bf16.msra.mxu0 %v1297
  %1478 = vmatprep.subr.bf16.mxu0 %v1302
  %1479 = vmatpush1.bf16.msra.mxu0 %v1301
  %1480 = vmatprep.subr.bf16.mxu0 %v1306
  %1481 = vmatpush1.bf16.msra.mxu0 %v1305
  %1482 = vmatprep.subr.bf16.mxu0 %v1310
  %1483 = vmatpush1.bf16.msra.mxu0 %v1309
  %1484 = vmatprep.subr.bf16.mxu0 %v1314
  %1485 = vmatpush1.bf16.msra.mxu0 %v1313
  %1486 = vmatprep.subr.bf16.mxu0 %v1318
  %1487 = vmatpush1.bf16.msra.mxu0 %v1317
  %1488 = vmatprep.subr.bf16.mxu0 %v1322
  %1489 = vmatpush1.bf16.msra.mxu0 %v1321
  %1490 = vmatprep.subr.bf16.mxu0 %v1326
  %1491 = vmatpush1.bf16.msra.mxu0 %v1325
  %1492 = vmatprep.subr.bf16.mxu0 %v1330
  %1493 = vmatpush1.bf16.msra.mxu0 %v1329
  %1494 = vmatprep.subr.bf16.mxu0 %v1334
  %1495 = vmatpush1.bf16.msra.mxu0 %v1333
  %1496 = vmatprep.subr.bf16.mxu0 %v1338
  %1497 = vmatpush1.bf16.msra.mxu0 %v1337
  %1498 = vmatprep.subr.bf16.mxu0 %v1342
  %1499 = vmatpush1.bf16.msra.mxu0 %v1341
  %1500 = vmatprep.subr.bf16.mxu0 %v1346
  %1501 = vmatpush1.bf16.msra.mxu0 %v1345
  %1502 = vmatprep.subr.bf16.mxu0 %v1350
  %1503 = vmatpush1.bf16.msra.mxu0 %v1349
  %1504 = vmatprep.subr.bf16.mxu0 %v1354
  %1505 = vmatpush1.bf16.msra.mxu0 %v1353
  %1506 = vmatprep.subr.bf16.mxu0 %v1358
  %1507 = vmatpush1.bf16.msra.mxu0 %v1357
  %1508 = vmatprep.mubr.bf16.mxu0 %v1036
  %1509 = vmatmul.mubr.bf16.gmra.mrb[0].mxu0 %v1035
  %v1510 = vpop.f32.mrb[0].mxu0
  %v1511 = vadd.f32 0.0, %v1510
  %v1512 = vpop.f32.mrb[0].mxu0
  %v1513 = vadd.f32 0.0, %v1512
  %v1514 = vpop.f32.mrb[0].mxu0
  %v1515 = vadd.f32 0.0, %v1514
  %v1516 = vpop.f32.mrb[0].mxu0
  %v1517 = vadd.f32 0.0, %v1516
  %1518 = vmatprep.mubr.bf16.mxu0 %v1038
  %1519 = vmatmul.mubr.bf16.gmra.mrb[0].mxu0 %v1037
  %v1520 = vpop.f32.mrb[0].mxu0
  %v1521 = vadd.f32 0.0, %v1520
  %v1522 = vpop.f32.mrb[0].mxu0
  %v1523 = vadd.f32 0.0, %v1522
  %v1524 = vpop.f32.mrb[0].mxu0
  %v1525 = vadd.f32 0.0, %v1524
  %v1526 = vpop.f32.mrb[0].mxu0
  %v1527 = vadd.f32 0.0, %v1526
  %1528 = vdwg.mxu0
  %v1529 = vld [vmem:[%s11] sm:$0xf]
  %v1530 = vld [vmem:[%s12] sm:$0xf]
  %v1531 = vadd.f32 %v1458, %v1462
  %v1532 = vadd.f32 %v1531, %v1468
  %v1533 = vadd.f32 %v1532, %v1472
  %v1534 = vrot.slane %v1533, 4
  %v1535 = vadd.f32 %v1533, %v1534
  %v1536 = vrot.slane %v1535, 2
  %v1537 = vadd.f32 %v1535, %v1536
  %v1538 = vrot.slane %v1537, 1
  %v1539 = vadd.f32 %v1537, %v1538
  %v1540 = vadd.f32 %v1460, %v1464
  %v1541 = vadd.f32 %v1540, %v1470
  %v1542 = vadd.f32 %v1541, %v1474
  %v1543 = vrot.slane %v1542, 4
  %v1544 = vadd.f32 %v1542, %v1543
  %v1545 = vrot.slane %v1544, 2
  %v1546 = vadd.f32 %v1544, %v1545
  %v1547 = vrot.slane %v1546, 1
  %v1548 = vadd.f32 %v1546, %v1547
  %v1549 = vadd.f32 %v1511, %v1515
  %v1550 = vadd.f32 %v1549, %v1521
  %v1551 = vadd.f32 %v1550, %v1525
  %v1552 = vrot.slane %v1551, 4
  %v1553 = vadd.f32 %v1551, %v1552
  %v1554 = vrot.slane %v1553, 2
  %v1555 = vadd.f32 %v1553, %v1554
  %v1556 = vrot.slane %v1555, 1
  %v1557 = vadd.f32 %v1555, %v1556
  %v1558 = vadd.f32 %v1513, %v1517
  %v1559 = vadd.f32 %v1558, %v1523
  %v1560 = vadd.f32 %v1559, %v1527
  %v1561 = vrot.slane %v1560, 4
  %v1562 = vadd.f32 %v1560, %v1561
  %v1563 = vrot.slane %v1562, 2
  %v1564 = vadd.f32 %v1562, %v1563
  %v1565 = vrot.slane %v1564, 1
  %v1566 = vadd.f32 %v1564, %v1565
  %1567 = vrot.lane.b32.xlu0 %v1539, 32
  %v1568 = vpop.permute.xlu0 %1567
  %1569 = vrot.lane.b32.xlu0 %v1548, 32
  %v1570 = vpop.permute.xlu0 %1569
  %1571 = vrot.lane.b32.xlu0 %v1557, 32
  %v1572 = vpop.permute.xlu0 %1571
  %1573 = vrot.lane.b32.xlu0 %v1566, 32
  %v1574 = vpop.permute.xlu0 %1573
  %v1575 = vsel %vm88, %v1572, %v1574
  %v1576 = vsel %vm88, %v1570, %v1572
  %v1577 = vsel %vm88, %v1568, %v1570
  %v1578 = vsel %vm88, %v1574, %v1568
  %v1579 = vadd.f32 %v1539, %v1578
  %v1580 = vadd.f32 %v1548, %v1577
  %v1581 = vadd.f32 %v1557, %v1576
  %v1582 = vadd.f32 %v1566, %v1575
  %1583 = vrot.lane.b32.xlu0 %v1579, 64
  %v1584 = vpop.permute.xlu0 %1583
  %1585 = vrot.lane.b32.xlu0 %v1580, 64
  %v1586 = vpop.permute.xlu0 %1585
  %1587 = vrot.lane.b32.xlu0 %v1581, 64
  %v1588 = vpop.permute.xlu0 %1587
  %1589 = vrot.lane.b32.xlu0 %v1582, 64
  %v1590 = vpop.permute.xlu0 %1589
  %v1591 = vsel %vm97, %v1588, %v1590
  %v1592 = vsel %vm97, %v1586, %v1588
  %v1593 = vsel %vm97, %v1584, %v1586
  %v1594 = vsel %vm97, %v1590, %v1584
  %v1595 = vadd.f32 %v1579, %v1594
  %v1596 = vadd.f32 %v1580, %v1593
  %v1597 = vadd.f32 %v1581, %v1592
  %v1598 = vadd.f32 %v1582, %v1591
  %v1599 = vadd.f32 %v1595, %v1598
  %v1600 = vadd.f32 %v1596, %v1595
  %v1601 = vadd.f32 %v1597, %v1596
  %v1602 = vadd.f32 %v1598, %v1597
  %v1603 = vadd.f32 %v1599, %v1601
  %v1604 = vadd.f32 %v1600, %v1602
  %v1605 = vmul.f32 %v1458, %v1458
  %v1606 = vmul.f32 %v1460, %v1460
  %v1607 = vmul.f32 %v1511, %v1511
  %v1608 = vmul.f32 %v1513, %v1513
  %v1609 = vmul.f32 %v1462, %v1462
  %v1610 = vmul.f32 %v1464, %v1464
  %v1611 = vmul.f32 %v1515, %v1515
  %v1612 = vmul.f32 %v1517, %v1517
  %v1613 = vmul.f32 %v1468, %v1468
  %v1614 = vmul.f32 %v1470, %v1470
  %v1615 = vmul.f32 %v1521, %v1521
  %v1616 = vmul.f32 %v1523, %v1523
  %v1617 = vmul.f32 %v1472, %v1472
  %v1618 = vmul.f32 %v1474, %v1474
  %v1619 = vmul.f32 %v1525, %v1525
  %v1620 = vmul.f32 %v1527, %v1527
  %v1621 = vadd.f32 %v1605, %v1609
  %v1622 = vadd.f32 %v1621, %v1613
  %v1623 = vadd.f32 %v1622, %v1617
  %v1624 = vrot.slane %v1623, 4
  %v1625 = vadd.f32 %v1623, %v1624
  %v1626 = vrot.slane %v1625, 2
  %v1627 = vadd.f32 %v1625, %v1626
  %v1628 = vrot.slane %v1627, 1
  %v1629 = vadd.f32 %v1627, %v1628
  %v1630 = vadd.f32 %v1606, %v1610
  %v1631 = vadd.f32 %v1630, %v1614
  %v1632 = vadd.f32 %v1631, %v1618
  %v1633 = vrot.slane %v1632, 4
  %v1634 = vadd.f32 %v1632, %v1633
  %v1635 = vrot.slane %v1634, 2
  %v1636 = vadd.f32 %v1634, %v1635
  %v1637 = vrot.slane %v1636, 1
  %v1638 = vadd.f32 %v1636, %v1637
  %v1639 = vadd.f32 %v1607, %v1611
  %v1640 = vadd.f32 %v1639, %v1615
  %v1641 = vadd.f32 %v1640, %v1619
  %v1642 = vrot.slane %v1641, 4
  %v1643 = vadd.f32 %v1641, %v1642
  %v1644 = vrot.slane %v1643, 2
  %v1645 = vadd.f32 %v1643, %v1644
  %v1646 = vrot.slane %v1645, 1
  %v1647 = vadd.f32 %v1645, %v1646
  %v1648 = vadd.f32 %v1608, %v1612
  %v1649 = vadd.f32 %v1648, %v1616
  %v1650 = vadd.f32 %v1649, %v1620
  %v1651 = vrot.slane %v1650, 4
  %v1652 = vadd.f32 %v1650, %v1651
  %v1653 = vrot.slane %v1652, 2
  %v1654 = vadd.f32 %v1652, %v1653
  %v1655 = vrot.slane %v1654, 1
  %v1656 = vadd.f32 %v1654, %v1655
  %1657 = vrot.lane.b32.xlu0 %v1629, 32
  %v1658 = vpop.permute.xlu0 %1657
  %1659 = vrot.lane.b32.xlu0 %v1638, 32
  %v1660 = vpop.permute.xlu0 %1659
  %1661 = vrot.lane.b32.xlu0 %v1647, 32
  %v1662 = vpop.permute.xlu0 %1661
  %1663 = vrot.lane.b32.xlu0 %v1656, 32
  %v1664 = vpop.permute.xlu0 %1663
  %v1665 = vsel %vm88, %v1662, %v1664
  %v1666 = vsel %vm88, %v1660, %v1662
  %v1667 = vsel %vm88, %v1658, %v1660
  %v1668 = vsel %vm88, %v1664, %v1658
  %v1669 = vadd.f32 %v1629, %v1668
  %v1670 = vadd.f32 %v1638, %v1667
  %v1671 = vadd.f32 %v1647, %v1666
  %v1672 = vadd.f32 %v1656, %v1665
  %1673 = vrot.lane.b32.xlu0 %v1669, 64
  %v1674 = vpop.permute.xlu0 %1673
  %1675 = vrot.lane.b32.xlu0 %v1670, 64
  %v1676 = vpop.permute.xlu0 %1675
  %1677 = vrot.lane.b32.xlu0 %v1671, 64
  %v1678 = vpop.permute.xlu0 %1677
  %1679 = vrot.lane.b32.xlu0 %v1672, 64
  %v1680 = vpop.permute.xlu0 %1679
  %v1681 = vsel %vm97, %v1678, %v1680
  %v1682 = vsel %vm97, %v1676, %v1678
  %v1683 = vsel %vm97, %v1674, %v1676
  %v1684 = vsel %vm97, %v1680, %v1674
  %v1685 = vadd.f32 %v1669, %v1684
  %v1686 = vadd.f32 %v1670, %v1683
  %v1687 = vadd.f32 %v1671, %v1682
  %v1688 = vadd.f32 %v1672, %v1681
  %v1689 = vadd.f32 %v1685, %v1688
  %v1690 = vadd.f32 %v1686, %v1685
  %v1691 = vadd.f32 %v1687, %v1686
  %v1692 = vadd.f32 %v1688, %v1687
  %v1693 = vadd.f32 %v1689, %v1691
  %v1694 = vadd.f32 %v1690, %v1692
  %v1695 = vmul.f32 %v1603, 0.001953125
  %v1696 = vmul.f32 %v1604, 0.001953125
  %v1697 = vmul.f32 %v1693, 0.001953125
  %v1698 = vmul.f32 %v1694, 0.001953125
  %v1699 = vmul.f32 %v1695, %v1695
  %v1700 = vmul.f32 %v1696, %v1696
  %v1701 = vsub.f32 %v1697, %v1699
  %v1702 = vsub.f32 %v1698, %v1700
  %v1703 = vmax.f32 %v1701, 0.0
  %v1704 = vmax.f32 %v1702, 0.0
  %v1705 = vlaneseq
  %v1706 = vshrl.u32 %v1705, 7
  %v1707 = vsub.s32 0, %v1706
  %v1708 = vrot.slane %v1695, %v1707
  %v1709 = vlaneseq
  %v1710 = vshrl.u32 %v1709, 7
  %v1711 = vsub.s32 0, %v1710
  %v1712 = vrot.slane %v1696, %v1711
  %v1713 = vsub.f32 %v1458, %v1708
  %v1714 = vsub.f32 %v1460, %v1712
  %v1715 = vsub.f32 %v1511, %v1708
  %v1716 = vsub.f32 %v1513, %v1712
  %v1717 = vsub.f32 %v1462, %v1708
  %v1718 = vsub.f32 %v1464, %v1712
  %v1719 = vsub.f32 %v1515, %v1708
  %v1720 = vsub.f32 %v1517, %v1712
  %v1721 = vsub.f32 %v1468, %v1708
  %v1722 = vsub.f32 %v1470, %v1712
  %v1723 = vsub.f32 %v1521, %v1708
  %v1724 = vsub.f32 %v1523, %v1712
  %v1725 = vsub.f32 %v1472, %v1708
  %v1726 = vsub.f32 %v1474, %v1712
  %v1727 = vsub.f32 %v1525, %v1708
  %v1728 = vsub.f32 %v1527, %v1712
  %v1729 = vadd.f32 %v1703, 1e-05
  %v1730 = vadd.f32 %v1704, 1e-05
  %v1731 = vrsqrt.pop %v1729
  %v1732 = vrsqrt.pop %v1730
  %v1733 = vlaneseq
  %v1734 = vshrl.u32 %v1733, 7
  %v1735 = vsub.s32 0, %v1734
  %v1736 = vrot.slane %v1731, %v1735
  %v1737 = vlaneseq
  %v1738 = vshrl.u32 %v1737, 7
  %v1739 = vsub.s32 0, %v1738
  %v1740 = vrot.slane %v1732, %v1739
  %v1741 = vmul.f32 %v1713, %v1736
  %v1742 = vmul.f32 %v1714, %v1740
  %v1743 = vmul.f32 %v1715, %v1736
  %v1744 = vmul.f32 %v1716, %v1740
  %v1745 = vmul.f32 %v1717, %v1736
  %v1746 = vmul.f32 %v1718, %v1740
  %v1747 = vmul.f32 %v1719, %v1736
  %v1748 = vmul.f32 %v1720, %v1740
  %v1749 = vmul.f32 %v1721, %v1736
  %v1750 = vmul.f32 %v1722, %v1740
  %v1751 = vmul.f32 %v1723, %v1736
  %v1752 = vmul.f32 %v1724, %v1740
  %v1753 = vmul.f32 %v1725, %v1736
  %v1754 = vmul.f32 %v1726, %v1740
  %v1755 = vmul.f32 %v1727, %v1736
  %v1756 = vmul.f32 %v1728, %v1740
  %v1758 = vlaneseq
  %v1759 = vshrl.u32 %v1758, 7
  %v1760 = vsub.s32 0, %v1759
  %v1761 = vrot.slane %v1529, %v1760
  %v1762 = vlaneseq
  %v1763 = vshrl.u32 %v1762, 7
  %v1764 = vsub.s32 1, %v1763
  %v1765 = vrot.slane %v1529, %v1764
  %v1766 = vlaneseq
  %v1767 = vshrl.u32 %v1766, 7
  %v1768 = vsub.s32 2, %v1767
  %v1769 = vrot.slane %v1529, %v1768
  %v1770 = vlaneseq
  %v1771 = vshrl.u32 %v1770, 7
  %v1772 = vsub.s32 3, %v1771
  %v1773 = vrot.slane %v1529, %v1772
  %v1778 = vmul.f32 %v1741, %v1761
  %v1779 = vmul.f32 %v1742, %v1765
  %v1780 = vmul.f32 %v1743, %v1769
  %v1781 = vmul.f32 %v1744, %v1773
  %v1782 = vmul.f32 %v1745, %v1761
  %v1783 = vmul.f32 %v1746, %v1765
  %v1784 = vmul.f32 %v1747, %v1769
  %v1785 = vmul.f32 %v1748, %v1773
  %v1786 = vmul.f32 %v1749, %v1761
  %v1787 = vmul.f32 %v1750, %v1765
  %v1788 = vmul.f32 %v1751, %v1769
  %v1789 = vmul.f32 %v1752, %v1773
  %v1790 = vmul.f32 %v1753, %v1761
  %v1791 = vmul.f32 %v1754, %v1765
  %v1792 = vmul.f32 %v1755, %v1769
  %v1793 = vmul.f32 %v1756, %v1773
  %v1795 = vlaneseq
  %v1796 = vshrl.u32 %v1795, 7
  %v1797 = vsub.s32 0, %v1796
  %v1798 = vrot.slane %v1530, %v1797
  %v1799 = vlaneseq
  %v1800 = vshrl.u32 %v1799, 7
  %v1801 = vsub.s32 1, %v1800
  %v1802 = vrot.slane %v1530, %v1801
  %v1803 = vlaneseq
  %v1804 = vshrl.u32 %v1803, 7
  %v1805 = vsub.s32 2, %v1804
  %v1806 = vrot.slane %v1530, %v1805
  %v1807 = vlaneseq
  %v1808 = vshrl.u32 %v1807, 7
  %v1809 = vsub.s32 3, %v1808
  %v1810 = vrot.slane %v1530, %v1809
  %v1815 = vadd.f32 %v1778, %v1798
  %v1816 = vadd.f32 %v1779, %v1802
  %v1817 = vadd.f32 %v1780, %v1806
  %v1818 = vadd.f32 %v1781, %v1810
  %v1819 = vadd.f32 %v1782, %v1798
  %v1820 = vadd.f32 %v1783, %v1802
  %v1821 = vadd.f32 %v1784, %v1806
  %v1822 = vadd.f32 %v1785, %v1810
  %v1823 = vadd.f32 %v1786, %v1798
  %v1824 = vadd.f32 %v1787, %v1802
  %v1825 = vadd.f32 %v1788, %v1806
  %v1826 = vadd.f32 %v1789, %v1810
  %v1827 = vadd.f32 %v1790, %v1798
  %v1828 = vadd.f32 %v1791, %v1802
  %v1829 = vadd.f32 %v1792, %v1806
  %v1830 = vadd.f32 %v1793, %v1810
  %v1863 = vunpack.c.l.b16 %v1003
  %v1864 = vunpack.c.h.b16 %v1003
  %v1865 = vunpack.c.l.b16 %v1004
  %v1866 = vunpack.c.h.b16 %v1004
  %v1867 = vunpack.c.l.b16 %v1005
  %v1868 = vunpack.c.h.b16 %v1005
  %v1869 = vunpack.c.l.b16 %v1006
  %v1870 = vunpack.c.h.b16 %v1006
  %v1871 = vunpack.c.l.b16 %v1007
  %v1872 = vunpack.c.h.b16 %v1007
  %v1873 = vunpack.c.l.b16 %v1008
  %v1874 = vunpack.c.h.b16 %v1008
  %v1875 = vunpack.c.l.b16 %v1009
  %v1876 = vunpack.c.h.b16 %v1009
  %v1877 = vunpack.c.l.b16 %v1010
  %v1878 = vunpack.c.h.b16 %v1010
  %v1879 = vunpack.c.l.b16 %v1011
  %v1880 = vunpack.c.h.b16 %v1011
  %v1881 = vunpack.c.l.b16 %v1012
  %v1882 = vunpack.c.h.b16 %v1012
  %v1883 = vunpack.c.l.b16 %v1013
  %v1884 = vunpack.c.h.b16 %v1013
  %v1885 = vunpack.c.l.b16 %v1014
  %v1886 = vunpack.c.h.b16 %v1014
  %v1887 = vunpack.c.l.b16 %v1015
  %v1888 = vunpack.c.h.b16 %v1015
  %v1889 = vunpack.c.l.b16 %v1016
  %v1890 = vunpack.c.h.b16 %v1016
  %v1891 = vunpack.c.l.b16 %v1017
  %v1892 = vunpack.c.h.b16 %v1017
  %v1893 = vunpack.c.l.b16 %v1018
  %v1894 = vunpack.c.h.b16 %v1018
  %v1895 = vunpack.c.l.b16 %v1019
  %v1896 = vunpack.c.h.b16 %v1019
  %v1897 = vunpack.c.l.b16 %v1020
  %v1898 = vunpack.c.h.b16 %v1020
  %v1899 = vunpack.c.l.b16 %v1021
  %v1900 = vunpack.c.h.b16 %v1021
  %v1901 = vunpack.c.l.b16 %v1022
  %v1902 = vunpack.c.h.b16 %v1022
  %v1903 = vunpack.c.l.b16 %v1023
  %v1904 = vunpack.c.h.b16 %v1023
  %v1905 = vunpack.c.l.b16 %v1024
  %v1906 = vunpack.c.h.b16 %v1024
  %v1907 = vunpack.c.l.b16 %v1025
  %v1908 = vunpack.c.h.b16 %v1025
  %v1909 = vunpack.c.l.b16 %v1026
  %v1910 = vunpack.c.h.b16 %v1026
  %v1911 = vunpack.c.l.b16 %v1027
  %v1912 = vunpack.c.h.b16 %v1027
  %v1913 = vunpack.c.l.b16 %v1028
  %v1914 = vunpack.c.h.b16 %v1028
  %v1915 = vunpack.c.l.b16 %v1029
  %v1916 = vunpack.c.h.b16 %v1029
  %v1917 = vunpack.c.l.b16 %v1030
  %v1918 = vunpack.c.h.b16 %v1030
  %v1919 = vunpack.c.l.b16 %v1031
  %v1920 = vunpack.c.h.b16 %v1031
  %v1921 = vunpack.c.l.b16 %v1032
  %v1922 = vunpack.c.h.b16 %v1032
  %v1923 = vunpack.c.l.b16 %v1033
  %v1924 = vunpack.c.h.b16 %v1033
  %v1925 = vunpack.c.l.b16 %v1034
  %v1926 = vunpack.c.h.b16 %v1034
  %v1927 = vpack.c.b16 %v1867, %v1863
  %v1928 = vpack.c.b16 %v1868, %v1864
  %v1929 = vpack.c.b16 %v1869, %v1865
  %v1930 = vpack.c.b16 %v1870, %v1866
  %v1931 = vpack.c.b16 %v1875, %v1871
  %v1932 = vpack.c.b16 %v1876, %v1872
  %v1933 = vpack.c.b16 %v1877, %v1873
  %v1934 = vpack.c.b16 %v1878, %v1874
  %v1935 = vpack.c.b16 %v1883, %v1879
  %v1936 = vpack.c.b16 %v1884, %v1880
  %v1937 = vpack.c.b16 %v1885, %v1881
  %v1938 = vpack.c.b16 %v1886, %v1882
  %v1939 = vpack.c.b16 %v1891, %v1887
  %v1940 = vpack.c.b16 %v1892, %v1888
  %v1941 = vpack.c.b16 %v1893, %v1889
  %v1942 = vpack.c.b16 %v1894, %v1890
  %v1943 = vpack.c.b16 %v1899, %v1895
  %v1944 = vpack.c.b16 %v1900, %v1896
  %v1945 = vpack.c.b16 %v1901, %v1897
  %v1946 = vpack.c.b16 %v1902, %v1898
  %v1947 = vpack.c.b16 %v1907, %v1903
  %v1948 = vpack.c.b16 %v1908, %v1904
  %v1949 = vpack.c.b16 %v1909, %v1905
  %v1950 = vpack.c.b16 %v1910, %v1906
  %v1951 = vpack.c.b16 %v1915, %v1911
  %v1952 = vpack.c.b16 %v1916, %v1912
  %v1953 = vpack.c.b16 %v1917, %v1913
  %v1954 = vpack.c.b16 %v1918, %v1914
  %v1955 = vpack.c.b16 %v1923, %v1919
  %v1956 = vpack.c.b16 %v1924, %v1920
  %v1957 = vpack.c.b16 %v1925, %v1921
  %v1958 = vpack.c.b16 %v1926, %v1922
  %1991 = vmatprep.subr.bf16.mxu0 %v1928
  %1992 = vmatpush1.bf16.msra.mxu0 %v1927
  %1993 = vmatprep.subr.bf16.mxu0 %v1932
  %1994 = vmatpush1.bf16.msra.mxu0 %v1931
  %1995 = vmatprep.subr.bf16.mxu0 %v1936
  %1996 = vmatpush1.bf16.msra.mxu0 %v1935
  %1997 = vmatprep.subr.bf16.mxu0 %v1940
  %1998 = vmatpush1.bf16.msra.mxu0 %v1939
  %1999 = vmatprep.subr.bf16.mxu0 %v1944
  %2000 = vmatpush1.bf16.msra.mxu0 %v1943
  %2001 = vmatprep.subr.bf16.mxu0 %v1948
  %2002 = vmatpush1.bf16.msra.mxu0 %v1947
  %2003 = vmatprep.subr.bf16.mxu0 %v1952
  %2004 = vmatpush1.bf16.msra.mxu0 %v1951
  %2005 = vmatprep.subr.bf16.mxu0 %v1956
  %2006 = vmatpush1.bf16.msra.mxu0 %v1955
  %2007 = vmatprep.subr.bf16.mxu0 0
  %2008 = vmatpush1.bf16.msra.mxu0 0
  %2009 = vmatprep.subr.bf16.mxu0 0
  %2010 = vmatpush1.bf16.msra.mxu0 0
  %2011 = vmatprep.subr.bf16.mxu0 0
  %2012 = vmatpush1.bf16.msra.mxu0 0
  %2013 = vmatprep.subr.bf16.mxu0 0
  %2014 = vmatpush1.bf16.msra.mxu0 0
  %2015 = vmatprep.subr.bf16.mxu0 0
  %2016 = vmatpush1.bf16.msra.mxu0 0
  %2017 = vmatprep.subr.bf16.mxu0 0
  %2018 = vmatpush1.bf16.msra.mxu0 0
  %2019 = vmatprep.subr.bf16.mxu0 0
  %2020 = vmatpush1.bf16.msra.mxu0 0
  %2021 = vmatprep.subr.bf16.mxu0 0
  %2022 = vmatpush1.bf16.msra.mxu0 0
  %2023 = vmatprep.mubr.bf16.mxu0 0
  %2024 = vmatmul.mubr.bf16.gmra.mrb[0].mxu0 %v1001
  %v2025 = vpop.f32.mrb[0].mxu0
  %v2026 = vadd.f32 %v1815, %v2025
  %v2027 = vpop.f32.mrb[0].mxu0
  %v2028 = vadd.f32 %v1816, %v2027
  %v2029 = vpop.f32.mrb[0].mxu0
  %v2030 = vadd.f32 %v1819, %v2029
  %v2031 = vpop.f32.mrb[0].mxu0
  %v2032 = vadd.f32 %v1820, %v2031
  %2033 = vmatprep.mubr.bf16.mxu0 0
  %2034 = vmatmul.mubr.bf16.gmra.mrb[0].mxu0 %v1002
  %v2035 = vpop.f32.mrb[0].mxu0
  %v2036 = vadd.f32 %v1823, %v2035
  %v2037 = vpop.f32.mrb[0].mxu0
  %v2038 = vadd.f32 %v1824, %v2037
  %v2039 = vpop.f32.mrb[0].mxu0
  %v2040 = vadd.f32 %v1827, %v2039
  %v2041 = vpop.f32.mrb[0].mxu0
  %v2042 = vadd.f32 %v1828, %v2041
  %2043 = vdwg.mxu0
  %2044 = vmatprep.subr.bf16.mxu0 %v1930
  %2045 = vmatpush1.bf16.msra.mxu0 %v1929
  %2046 = vmatprep.subr.bf16.mxu0 %v1934
  %2047 = vmatpush1.bf16.msra.mxu0 %v1933
  %2048 = vmatprep.subr.bf16.mxu0 %v1938
  %2049 = vmatpush1.bf16.msra.mxu0 %v1937
  %2050 = vmatprep.subr.bf16.mxu0 %v1942
  %2051 = vmatpush1.bf16.msra.mxu0 %v1941
  %2052 = vmatprep.subr.bf16.mxu0 %v1946
  %2053 = vmatpush1.bf16.msra.mxu0 %v1945
  %2054 = vmatprep.subr.bf16.mxu0 %v1950
  %2055 = vmatpush1.bf16.msra.mxu0 %v1949
  %2056 = vmatprep.subr.bf16.mxu0 %v1954
  %2057 = vmatpush1.bf16.msra.mxu0 %v1953
  %2058 = vmatprep.subr.bf16.mxu0 %v1958
  %2059 = vmatpush1.bf16.msra.mxu0 %v1957
  %2060 = vmatprep.subr.bf16.mxu0 0
  %2061 = vmatpush1.bf16.msra.mxu0 0
  %2062 = vmatprep.subr.bf16.mxu0 0
  %2063 = vmatpush1.bf16.msra.mxu0 0
  %2064 = vmatprep.subr.bf16.mxu0 0
  %2065 = vmatpush1.bf16.msra.mxu0 0
  %2066 = vmatprep.subr.bf16.mxu0 0
  %2067 = vmatpush1.bf16.msra.mxu0 0
  %2068 = vmatprep.subr.bf16.mxu0 0
  %2069 = vmatpush1.bf16.msra.mxu0 0
  %2070 = vmatprep.subr.bf16.mxu0 0
  %2071 = vmatpush1.bf16.msra.mxu0 0
  %2072 = vmatprep.subr.bf16.mxu0 0
  %2073 = vmatpush1.bf16.msra.mxu0 0
  %2074 = vmatprep.subr.bf16.mxu0 0
  %2075 = vmatpush1.bf16.msra.mxu0 0
  %2076 = vmatprep.mubr.bf16.mxu0 0
  %2077 = vmatmul.mubr.bf16.gmra.mrb[0].mxu0 %v1001
  %v2078 = vpop.f32.mrb[0].mxu0
  %v2079 = vadd.f32 %v1817, %v2078
  %v2080 = vpop.f32.mrb[0].mxu0
  %v2081 = vadd.f32 %v1818, %v2080
  %v2082 = vpop.f32.mrb[0].mxu0
  %v2083 = vadd.f32 %v1821, %v2082
  %v2084 = vpop.f32.mrb[0].mxu0
  %v2085 = vadd.f32 %v1822, %v2084
  %2086 = vmatprep.mubr.bf16.mxu0 0
  %2087 = vmatmul.mubr.bf16.gmra.mrb[0].mxu0 %v1002
  %v2088 = vpop.f32.mrb[0].mxu0
  %v2089 = vadd.f32 %v1825, %v2088
  %v2090 = vpop.f32.mrb[0].mxu0
  %v2091 = vadd.f32 %v1826, %v2090
  %v2092 = vpop.f32.mrb[0].mxu0
  %v2093 = vadd.f32 %v1829, %v2092
  %v2094 = vpop.f32.mrb[0].mxu0
  %v2095 = vadd.f32 %v1830, %v2094
  %2096 = vdwg.mxu0
  %2097 = vst [vmem:[%s13] sm:$0xff] %v2026
  %2098 = vst [vmem:[%s13 + $0x8] sm:$0xff] %v2028
  %2099 = vst [vmem:[%s13 + $0x10] sm:$0xff] %v2079
  %2100 = vst [vmem:[%s13 + $0x18] sm:$0xff] %v2081
  %2101 = vst [vmem:[%s13 + $0x20] sm:$0xff] %v2030
  %2102 = vst [vmem:[%s13 + $0x28] sm:$0xff] %v2032
  %2103 = vst [vmem:[%s13 + $0x30] sm:$0xff] %v2083
  %2104 = vst [vmem:[%s13 + $0x38] sm:$0xff] %v2085
  %2105 = vst [vmem:[%s13 + $0x40] sm:$0xff] %v2036
  %2106 = vst [vmem:[%s13 + $0x48] sm:$0xff] %v2038
  %2107 = vst [vmem:[%s13 + $0x50] sm:$0xff] %v2089
  %2108 = vst [vmem:[%s13 + $0x58] sm:$0xff] %v2091
  %2109 = vst [vmem:[%s13 + $0x60] sm:$0xff] %v2040
  %2110 = vst [vmem:[%s13 + $0x68] sm:$0xff] %v2042
  %2111 = vst [vmem:[%s13 + $0x70] sm:$0xff] %v2093
  %2112 = vst [vmem:[%s13 + $0x78] sm:$0xff] %v2095
  // Predicated region
  $region54: #{bottleneck_forward.1} parent=0 // pred_check
    _
  $region55: #{bottleneck_forward.1} parent=0 // pred_check_branch
    %2114 = sbr.rel (0) target = $region57
  $region56: #{bottleneck_forward.1} parent=0 // pred_region
    _
  $region57: #{bottleneck_forward.1} parent=0 // pred_fallthru
    _
  // Predicated region
  $region58: #{bottleneck_forward.1} parent=0 // pred_check
    _
  $region59: #{bottleneck_forward.1} parent=0 // pred_check_branch
    %2116 = sbr.rel (0) target = $region61
  $region60: #{bottleneck_forward.1} parent=0 // pred_region
    _
  $region61: #{bottleneck_forward.1} parent=0 // pred_fallthru
    _

</llo_original>
